<compile_context>
chip_gen: v5e
topology: v5e:2x2
jax: 0.10.0
libtpu: 0.0.40
codegen_flags: <defaults>
</compile_context>

<pallas_src>
import functools
import math

import jax
import jax.numpy as jnp
import numpy as np
from jax import lax
from jax.experimental import pallas as pl
from jax.experimental.pallas import tpu as pltpu


# --------------------------------------------------------------------------
# Pallas kernels
# --------------------------------------------------------------------------
def _lstm_recurrence_kernel(gx_ref, wh_ref, h0_ref, c0_ref,
                            h_all_ref, hN_ref, cN_ref,
                            h_scr, c_scr, *, hidden_size, t_block, unroll):
    """One grid step = `t_block` LSTM time steps (PyTorch gate order i, f, g, o).

    gx_ref:    (B, Tb, 4H)  precomputed x_t @ W_ih^T + enc @ W_ih_h^T + b_ih + b_hh
    wh_ref:    (H, 4H)      W_hh^T (resident)
    h0/c0:     (B, H)       initial state (resident)
    h_all_ref: (B, Tb, H)   per-step hidden states (batch-first, dense)
    hN/cN:     (B, H)       final state (written on last grid step only)
    """
    t = pl.program_id(0)
    H = hidden_size

    @pl.when(t == 0)
    def _():
        h_scr[...] = h0_ref[...]
        c_scr[...] = c0_ref[...]

    wh = wh_ref[...]  # hoist the resident weight load out of the loop

    def step(s, carry):
        h, c = carry
        # Only the serial, h-dependent matmul remains inside the recurrence.
        gates = gx_ref[:, s, :] + jnp.dot(h, wh, preferred_element_type=jnp.float32)
        i_g = jax.nn.sigmoid(gates[:, 0 * H:1 * H])
        f_g = jax.nn.sigmoid(gates[:, 1 * H:2 * H])
        g_g = jnp.tanh(gates[:, 2 * H:3 * H])
        o_g = jax.nn.sigmoid(gates[:, 3 * H:4 * H])
        c_new = f_g * c + i_g * g_g
        h_new = o_g * jnp.tanh(c_new)
        h_all_ref[:, s, :] = h_new
        return (h_new, c_new)

    h, c = lax.fori_loop(0, t_block, step, (h_scr[...], c_scr[...]),
                         unroll=unroll)
    h_scr[...] = h
    c_scr[...] = c

    @pl.when(t == pl.num_programs(0) - 1)
    def _():
        hN_ref[...] = h
        cN_ref[...] = c


def _projection_kernel(h_ref, wo_ref, bo_ref, out_ref):
    """Output projection tile: one (B*Tt, H) @ (H, Vt) matmul, batch-first out.

    h_ref:   (B, Tt, H)  batch-first hidden states
    wo_ref:  (H, Vt)     W_lin^T vocab tile (resident across the time axis)
    bo_ref:  (1, Vt)
    out_ref: (B, Tt, Vt) batch-first logits tile
    """
    b, tt, hdim = h_ref.shape
    vt = wo_ref.shape[1]
    h2d = h_ref[...].reshape(b * tt, hdim)          # contiguous view (Tt % 8 == 0)
    acc = jnp.dot(h2d, wo_ref[...], preferred_element_type=jnp.float32)
    out = acc + bo_ref[...]
    out_ref[...] = out.reshape(b, tt, vt).astype(out_ref.dtype)


# --------------------------------------------------------------------------
# Helpers
# --------------------------------------------------------------------------
def _round_up(n, m):
    return ((n + m - 1) // m) * m


def _pick_rec_tb(T, cap=64):
    """Largest multiple-of-8 divisor of T that is <= cap; fall back to T."""
    best = None
    d = 8
    while d <= min(T, cap):
        if T % d == 0:
            best = d
        d += 8
    return best if best is not None else T


def _vmem_limit(block_bytes, scratch_bytes, vmem_cap):
    # double-buffered pipeline blocks + scratch + headroom; floor at 32 MiB,
    # never exceed the physical capacity of the current generation.
    need = 2 * block_bytes + scratch_bytes + (2 << 20)
    limit = max(need, 32 << 20)
    limit = min(limit, max(need, vmem_cap - (4 << 20)))
    return int(limit)


# --------------------------------------------------------------------------
# Forward pass
# --------------------------------------------------------------------------
def decoder_forward(params, x_tokens, encoder_features, hidden=None, *,
                    t_block=None, time_tile=None, vocab_tile=None,
                    proj_in_dtype=jnp.float32):
    emb = params["embedding"]      # (V, E)
    w_ih = params["w_ih"]          # (4H, E+H)
    w_hh = params["w_hh"]          # (4H, H)
    b_ih = params["b_ih"]          # (4H,)
    b_hh = params["b_hh"]          # (4H,)
    w_lin = params["w_lin"]        # (V, H)
    b_lin = params["b_lin"]        # (V,)

    V, E = emb.shape
    H = w_hh.shape[1]
    f32 = jnp.float32

    x_tokens = jnp.asarray(x_tokens)
    if x_tokens.ndim > 2:
        x_tokens = jnp.squeeze(x_tokens)
    if x_tokens.ndim == 1:
        x_tokens = x_tokens.reshape(1, 1)
    B, T = x_tokens.shape

    try:
        vmem_cap = int(pltpu.get_tpu_info().vmem_capacity_bytes)
    except Exception:
        vmem_cap = 64 << 20   # conservative: v7x per-core VMEM

    # ---- hoisted, time-parallel precompute (plain XLA), batch-first -------
    # Encoder half of W_ih is time-invariant: compute its contribution once
    # and fold it (together with both biases) into the per-step gate input.
    w_ih_e = w_ih[:, :E].astype(f32)                       # (4H, E)
    w_ih_h = w_ih[:, E:].astype(f32)                       # (4H, H)
    enc_contrib = encoder_features.astype(f32) @ w_ih_h.T  # (B, 4H)
    bias = (b_ih + b_hh).astype(f32)[None, :]               # (1, 4H)

    xe = jnp.take(emb.astype(f32), x_tokens, axis=0)        # (B, T, E)
    gates_x = (jnp.einsum("bte,ge->btg", xe, w_ih_e)
               + (enc_contrib + bias)[:, None, :])           # (B, T, 4H)

    if hidden is None:
        h0 = jnp.zeros((B, H), f32)
        c0 = jnp.zeros((B, H), f32)
    else:
        if not (isinstance(hidden, (tuple, list)) and len(hidden) == 2):
            hidden = (hidden, jnp.zeros_like(hidden))
        h0 = jnp.asarray(hidden[0], f32).reshape(B, H)
        c0 = jnp.asarray(hidden[1], f32).reshape(B, H)

    wh = jnp.transpose(w_hh).astype(f32)     # (H, 4H)

    # ---- Pallas kernel 1: the serial LSTM recurrence ----------------------
    if t_block is not None:
        Tb = int(t_block)
        if T % Tb != 0 or not (Tb % 8 == 0 or Tb == T):
            raise ValueError("t_block must divide T and be a multiple of 8 (or == T)")
    else:
        Tb = _pick_rec_tb(T, cap=64)
    n_t = T // Tb
    unroll = max(1, math.gcd(Tb, 8))

    rec_block_bytes = 4 * (B * Tb * 4 * H + H * 4 * H + 2 * B * H
                           + B * Tb * H + 2 * B * H)
    rec_scratch_bytes = 4 * 2 * B * H

    rec_kernel = functools.partial(_lstm_recurrence_kernel,
                                   hidden_size=H, t_block=Tb, unroll=unroll)

    h_all, hN, cN = pl.pallas_call(
        rec_kernel,
        out_shape=(jax.ShapeDtypeStruct((B, T, H), f32),
                   jax.ShapeDtypeStruct((B, H), f32),
                   jax.ShapeDtypeStruct((B, H), f32)),
        grid_spec=pltpu.PrefetchScalarGridSpec(
            num_scalar_prefetch=0,
            grid=(n_t,),
            in_specs=[
                pl.BlockSpec((B, Tb, 4 * H), lambda t: (0, t, 0)),   # gates_x slab
                pl.BlockSpec((H, 4 * H), lambda t: (0, 0)),          # W_hh^T (resident)
                pl.BlockSpec((B, H), lambda t: (0, 0)),              # h0
                pl.BlockSpec((B, H), lambda t: (0, 0)),              # c0
            ],
            out_specs=[
                pl.BlockSpec((B, Tb, H), lambda t: (0, t, 0)),       # h_t slab
                pl.BlockSpec((B, H), lambda t: (0, 0)),              # h_final
                pl.BlockSpec((B, H), lambda t: (0, 0)),              # c_final
            ],
            scratch_shapes=[pltpu.VMEM((B, H), f32),                 # h carry
                            pltpu.VMEM((B, H), f32)]),               # c carry
        compiler_params=pltpu.CompilerParams(
            dimension_semantics=("arbitrary",),                      # serial recurrence
            vmem_limit_bytes=_vmem_limit(rec_block_bytes, rec_scratch_bytes,
                                         vmem_cap)),
    )(gates_x, wh, h0, c0)

    # ---- Pallas kernel 2: output projection, vocab-outer grid -------------
    budget = min(int(0.75 * vmem_cap), 100 << 20)

    Tt = int(time_tile) if time_tile is not None else min(256, _round_up(T, 8))
    Vt = int(vocab_tile) if vocab_tile is not None else min(2048, _round_up(V, 128))
    Tt = max(8, (Tt // 8) * 8)
    Vt = max(128, (Vt // 128) * 128)

    def _proj_block_bytes(tt, vt):
        return 4 * (B * tt * H + H * vt + vt + B * tt * vt)

    while 2 * _proj_block_bytes(Tt, Vt) + (4 << 20) > budget and Vt > 128:
        Vt = max(128, (Vt // 2) // 128 * 128)
    while 2 * _proj_block_bytes(Tt, Vt) + (4 << 20) > budget and Tt > 8:
        Tt = max(8, (Tt // 2) // 8 * 8)

    Tp = _round_up(T, Tt)
    Vp = _round_up(V, Vt)

    wo = jnp.transpose(w_lin).astype(f32)    # (H, V)
    bo = b_lin.astype(f32)[None, :]          # (1, V)
    h_proj = h_all
    if proj_in_dtype != f32:                 # optional bf16-input path (off by default)
        h_proj = h_proj.astype(proj_in_dtype)
        wo = wo.astype(proj_in_dtype)
    if Tp != T:
        h_proj = jnp.pad(h_proj, ((0, 0), (0, Tp - T), (0, 0)))
    if Vp != V:
        wo = jnp.pad(wo, ((0, 0), (0, Vp - V)))
        bo = jnp.pad(bo, ((0, 0), (0, Vp - V)))

    itemsize = jnp.dtype(proj_in_dtype).itemsize
    proj_block_bytes = (itemsize * (B * Tt * H + H * Vt)
                        + 4 * (Vt + B * Tt * Vt))

    logits = pl.pallas_call(
        _projection_kernel,
        out_shape=jax.ShapeDtypeStruct((B, Tp, Vp), f32),
        grid_spec=pltpu.PrefetchScalarGridSpec(
            num_scalar_prefetch=0,
            # vocab-outer / time-inner: the (H, Vt) weight tile stays resident
            # across the inner time axis; only tiny h slabs stream.
            grid=(Vp // Vt, Tp // Tt),
            in_specs=[
                pl.BlockSpec((B, Tt, H), lambda j, i: (0, i, 0)),    # h slab
                pl.BlockSpec((H, Vt), lambda j, i: (0, j)),          # W_lin^T tile
                pl.BlockSpec((1, Vt), lambda j, i: (0, j)),          # b_lin tile
            ],
            out_specs=pl.BlockSpec((B, Tt, Vt), lambda j, i: (0, i, j)),
        ),
        compiler_params=pltpu.CompilerParams(
            dimension_semantics=("parallel", "arbitrary"),
            vmem_limit_bytes=_vmem_limit(proj_block_bytes, 0, vmem_cap)),
    )(h_proj, wo, bo)

    if Tp != T or Vp != V:
        logits = logits[:, :T, :V]

    # PyTorch returns hidden/cell with a leading num_layers*num_directions = 1 axis.
    return logits, (hN[None, :, :], cN[None, :, :])


# --------------------------------------------------------------------------
# Pure-JAX reference (for verification)
# --------------------------------------------------------------------------
def decoder_forward_ref(params, x_tokens, encoder_features, hidden=None):
    emb, w_ih, w_hh = params["embedding"], params["w_ih"], params["w_hh"]
    b_ih, b_hh = params["b_ih"], params["b_hh"]
    w_lin, b_lin = params["w_lin"], params["b_lin"]
    H = w_hh.shape[1]
    B, T = x_tokens.shape

    xe = jnp.take(emb, x_tokens, axis=0)
    enc = jnp.broadcast_to(encoder_features[:, None, :], (B, T, H))
    xcat = jnp.concatenate([xe, enc], axis=2)
    xcat_tm = jnp.transpose(xcat, (1, 0, 2)).astype(jnp.float32)

    h0 = jnp.zeros((B, H), jnp.float32) if hidden is None else hidden[0].reshape(B, H)
    c0 = jnp.zeros((B, H), jnp.float32) if hidden is None else hidden[1].reshape(B, H)

    def step(carry, xt):
        h, c = carry
        gates = xt @ w_ih.T + b_ih + h @ w_hh.T + b_hh
        i_g = jax.nn.sigmoid(gates[:, 0 * H:1 * H])
        f_g = jax.nn.sigmoid(gates[:, 1 * H:2 * H])
        g_g = jnp.tanh(gates[:, 2 * H:3 * H])
        o_g = jax.nn.sigmoid(gates[:, 3 * H:4 * H])
        c_new = f_g * c + i_g * g_g
        h_new = o_g * jnp.tanh(c_new)
        return (h_new, c_new), h_new

    (hN, cN), hs = lax.scan(step, (h0, c0), xcat_tm)
    logits = jnp.einsum("tbh,vh->tbv", hs, w_lin) + b_lin
    return jnp.transpose(logits, (1, 0, 2)), (hN[None], cN[None])


def init_params(key, vocab_size, embedding_size, hidden_size):
    ks = jax.random.split(key, 7)
    scale = 0.1
    return {
        "embedding": scale * jax.random.normal(ks[0], (vocab_size, embedding_size), jnp.float32),
        "w_ih": scale * jax.random.normal(ks[1], (4 * hidden_size, embedding_size + hidden_size), jnp.float32),
        "w_hh": scale * jax.random.normal(ks[2], (4 * hidden_size, hidden_size), jnp.float32),
        "b_ih": scale * jax.random.normal(ks[3], (4 * hidden_size,), jnp.float32),
        "b_hh": scale * jax.random.normal(ks[4], (4 * hidden_size,), jnp.float32),
        "w_lin": scale * jax.random.normal(ks[5], (vocab_size, hidden_size), jnp.float32),
        "b_lin": scale * jax.random.normal(ks[6], (vocab_size,), jnp.float32),
    }


if __name__ == "__main__":
    # Small shapes consistent with the module (module defaults are E=128, H=512).
    VOCAB, EMB, HID = 32, 16, 32
    B, T = 2, 8

    key = jax.random.PRNGKey(0)
    kp, kx, ke = jax.random.split(key, 3)
    params = init_params(kp, VOCAB, EMB, HID)
    x_tokens = jax.random.randint(kx, (B, T), 0, VOCAB, dtype=jnp.int32)
    encoder_features = jax.random.normal(ke, (B, HID), jnp.float32)

    logits, (h1, c1) = decoder_forward(params, x_tokens, encoder_features, hidden=None)
    logits = jax.block_until_ready(logits)
    h1 = jax.block_until_ready(h1)
    c1 = jax.block_until_ready(c1)

    logits_ref, (h_ref, c_ref) = decoder_forward_ref(params, x_tokens, encoder_features)
    np.testing.assert_allclose(np.asarray(logits), np.asarray(logits_ref), rtol=1e-4, atol=1e-4)
    np.testing.assert_allclose(np.asarray(h1), np.asarray(h_ref), rtol=1e-4, atol=1e-4)
    np.testing.assert_allclose(np.asarray(c1), np.asarray(c_ref), rtol=1e-4, atol=1e-4)

    assert logits.shape == (B, T, VOCAB)
    assert h1.shape == (1, B, HID) and c1.shape == (1, B, HID)
    print("KERNEL_OK")
</pallas_src>

<mosaic_0001>
module attributes {stable_mosaic.version = 11 : i64} {
  func.func @_lstm_recurrence_kernel(%arg0: i32, %arg1: memref<2x8x128xf32, #tpu.memory_space<vmem>>, %arg2: memref<32x128xf32, #tpu.memory_space<vmem>>, %arg3: memref<2x32xf32, #tpu.memory_space<vmem>>, %arg4: memref<2x32xf32, #tpu.memory_space<vmem>>, %arg5: memref<2x8x32xf32, #tpu.memory_space<vmem>>, %arg6: memref<2x32xf32, #tpu.memory_space<vmem>>, %arg7: memref<2x32xf32, #tpu.memory_space<vmem>>, %arg8: memref<2x32xf32, #tpu.memory_space<vmem>>, %arg9: memref<2x32xf32, #tpu.memory_space<vmem>>) attributes {dimension_semantics = [#tpu.dimension_semantics<arbitrary>], iteration_bounds = array<i64: 1>, scalar_prefetch = 0 : i64, scratch_operands = 2 : i64, tpu.core_type = #tpu.core_type<tc>, window_params = [{transform_indices = @transform_0, window_bounds = array<i64: 2, 8, 128>}, {pipeline_mode = #tpu.pipeline_mode<synchronous>, transform_indices = @transform_1, window_bounds = array<i64: 32, 128>}, {pipeline_mode = #tpu.pipeline_mode<synchronous>, transform_indices = @transform_2, window_bounds = array<i64: 2, 32>}, {pipeline_mode = #tpu.pipeline_mode<synchronous>, transform_indices = @transform_3, window_bounds = array<i64: 2, 32>}, {transform_indices = @transform_4, window_bounds = array<i64: 2, 8, 32>}, {pipeline_mode = #tpu.pipeline_mode<synchronous>, transform_indices = @transform_5, window_bounds = array<i64: 2, 32>}, {pipeline_mode = #tpu.pipeline_mode<synchronous>, transform_indices = @transform_6, window_bounds = array<i64: 2, 32>}]} {
    %c0_i32 = arith.constant 0 : i32
    %0 = arith.cmpi eq, %arg0, %c0_i32 : i32
    %1 = arith.extui %0 : i1 to i32
    %c0_i32_0 = arith.constant 0 : i32
    %2 = arith.cmpi ne, %1, %c0_i32_0 : i32
    scf.if %2 {
      %c0_76 = arith.constant 0 : index
      %c0_77 = arith.constant 0 : index
      %283 = vector.load %arg3[%c0_76, %c0_77] : memref<2x32xf32, #tpu.memory_space<vmem>>, vector<2x32xf32>
      %c0_78 = arith.constant 0 : index
      %c0_79 = arith.constant 0 : index
      %284 = vector.load %arg8[%c0_78, %c0_79] : memref<2x32xf32, #tpu.memory_space<vmem>>, vector<2x32xf32>
      tpu.vector_store %arg8[%c0_78, %c0_79], %283 {strides = array<i32>} : memref<2x32xf32, #tpu.memory_space<vmem>>, vector<2x32xf32>,
      %c0_80 = arith.constant 0 : index
      %c0_81 = arith.constant 0 : index
      %285 = vector.load %arg4[%c0_80, %c0_81] : memref<2x32xf32, #tpu.memory_space<vmem>>, vector<2x32xf32>
      %c0_82 = arith.constant 0 : index
      %c0_83 = arith.constant 0 : index
      %286 = vector.load %arg9[%c0_82, %c0_83] : memref<2x32xf32, #tpu.memory_space<vmem>>, vector<2x32xf32>
      tpu.vector_store %arg9[%c0_82, %c0_83], %285 {strides = array<i32>} : memref<2x32xf32, #tpu.memory_space<vmem>>, vector<2x32xf32>,
    } else {
    }
    %c0 = arith.constant 0 : index
    %c0_1 = arith.constant 0 : index
    %3 = vector.load %arg2[%c0, %c0_1] : memref<32x128xf32, #tpu.memory_space<vmem>>, vector<32x128xf32>
    %c0_2 = arith.constant 0 : index
    %c0_3 = arith.constant 0 : index
    %4 = vector.load %arg8[%c0_2, %c0_3] : memref<2x32xf32, #tpu.memory_space<vmem>>, vector<2x32xf32>
    %c0_4 = arith.constant 0 : index
    %c0_5 = arith.constant 0 : index
    %5 = vector.load %arg9[%c0_4, %c0_5] : memref<2x32xf32, #tpu.memory_space<vmem>>, vector<2x32xf32>
    %c0_i32_6 = arith.constant 0 : i32
    %c0_7 = arith.constant 0 : index
    %6 = arith.index_cast %c0_i32_6 : i32 to index
    %c0_8 = arith.constant 0 : index
    %7 = vector.load %arg1[%c0_7, %6, %c0_8] : memref<2x8x128xf32, #tpu.memory_space<vmem>>, vector<2x1x128xf32>
    %8 = vector.shape_cast %7 : vector<2x1x128xf32> to vector<2x128xf32>
    %cst = arith.constant dense<0.000000e+00> : vector<2x128xf32>
    %9 = tpu.matmul %4, %3, %cst {dimension_numbers = #tpu.dot_dimension_numbers<[1], [0], [0], [1], [0, 0, 1, 1], [], []>} : vector<2x32xf32>, vector<32x128xf32>, vector<2x128xf32> -> vector<2x128xf32>
    %10 = arith.addf %8, %9 : vector<2x128xf32>
    %11 = vector.extract_strided_slice %10 {offsets = [0, 0], sizes = [2, 32], strides = [1, 1]} : vector<2x128xf32> to vector<2x32xf32>
    %12 = arith.negf %11 : vector<2x32xf32>
    %13 = math.exp %12 : vector<2x32xf32>
    %cst_9 = arith.constant 1.000000e+00 : f32
    %14 = vector.broadcast %cst_9 : f32 to vector<2x32xf32>
    %15 = arith.addf %14, %13 : vector<2x32xf32>
    %16 = arith.divf %14, %15 : vector<2x32xf32>
    %17 = vector.extract_strided_slice %10 {offsets = [0, 32], sizes = [2, 32], strides = [1, 1]} : vector<2x128xf32> to vector<2x32xf32>
    %18 = arith.negf %17 : vector<2x32xf32>
    %19 = math.exp %18 : vector<2x32xf32>
    %cst_10 = arith.constant 1.000000e+00 : f32
    %20 = vector.broadcast %cst_10 : f32 to vector<2x32xf32>
    %21 = arith.addf %20, %19 : vector<2x32xf32>
    %22 = arith.divf %20, %21 : vector<2x32xf32>
    %23 = vector.extract_strided_slice %10 {offsets = [0, 64], sizes = [2, 32], strides = [1, 1]} : vector<2x128xf32> to vector<2x32xf32>
    %24 = math.tanh %23 : vector<2x32xf32>
    %25 = vector.extract_strided_slice %10 {offsets = [0, 96], sizes = [2, 32], strides = [1, 1]} : vector<2x128xf32> to vector<2x32xf32>
    %26 = arith.negf %25 : vector<2x32xf32>
    %27 = math.exp %26 : vector<2x32xf32>
    %cst_11 = arith.constant 1.000000e+00 : f32
    %28 = vector.broadcast %cst_11 : f32 to vector<2x32xf32>
    %29 = arith.addf %28, %27 : vector<2x32xf32>
    %30 = arith.divf %28, %29 : vector<2x32xf32>
    %31 = arith.mulf %22, %5 : vector<2x32xf32>
    %32 = arith.mulf %16, %24 : vector<2x32xf32>
    %33 = arith.addf %31, %32 : vector<2x32xf32>
    %34 = math.tanh %33 : vector<2x32xf32>
    %35 = arith.mulf %30, %34 : vector<2x32xf32>
    %c0_12 = arith.constant 0 : index
    %36 = arith.index_cast %c0_i32_6 : i32 to index
    %c0_13 = arith.constant 0 : index
    %37 = vector.load %arg5[%c0_12, %36, %c0_13] : memref<2x8x32xf32, #tpu.memory_space<vmem>>, vector<2x1x32xf32>
    %38 = vector.shape_cast %37 : vector<2x1x32xf32> to vector<2x32xf32>
    %39 = vector.shape_cast %35 : vector<2x32xf32> to vector<2x1x32xf32>
    tpu.vector_store %arg5[%c0_12, %36, %c0_13], %39 {strides = array<i32>} : memref<2x8x32xf32, #tpu.memory_space<vmem>>, vector<2x1x32xf32>,
    %c1_i32 = arith.constant 1 : i32
    %c0_14 = arith.constant 0 : index
    %40 = arith.index_cast %c1_i32 : i32 to index
    %c0_15 = arith.constant 0 : index
    %41 = vector.load %arg1[%c0_14, %40, %c0_15] : memref<2x8x128xf32, #tpu.memory_space<vmem>>, vector<2x1x128xf32>
    %42 = vector.shape_cast %41 : vector<2x1x128xf32> to vector<2x128xf32>
    %cst_16 = arith.constant dense<0.000000e+00> : vector<2x128xf32>
    %43 = tpu.matmul %35, %3, %cst_16 {dimension_numbers = #tpu.dot_dimension_numbers<[1], [0], [0], [1], [0, 0, 1, 1], [], []>} : vector<2x32xf32>, vector<32x128xf32>, vector<2x128xf32> -> vector<2x128xf32>
    %44 = arith.addf %42, %43 : vector<2x128xf32>
    %45 = vector.extract_strided_slice %44 {offsets = [0, 0], sizes = [2, 32], strides = [1, 1]} : vector<2x128xf32> to vector<2x32xf32>
    %46 = arith.negf %45 : vector<2x32xf32>
    %47 = math.exp %46 : vector<2x32xf32>
    %cst_17 = arith.constant 1.000000e+00 : f32
    %48 = vector.broadcast %cst_17 : f32 to vector<2x32xf32>
    %49 = arith.addf %48, %47 : vector<2x32xf32>
    %50 = arith.divf %48, %49 : vector<2x32xf32>
    %51 = vector.extract_strided_slice %44 {offsets = [0, 32], sizes = [2, 32], strides = [1, 1]} : vector<2x128xf32> to vector<2x32xf32>
    %52 = arith.negf %51 : vector<2x32xf32>
    %53 = math.exp %52 : vector<2x32xf32>
    %cst_18 = arith.constant 1.000000e+00 : f32
    %54 = vector.broadcast %cst_18 : f32 to vector<2x32xf32>
    %55 = arith.addf %54, %53 : vector<2x32xf32>
    %56 = arith.divf %54, %55 : vector<2x32xf32>
    %57 = vector.extract_strided_slice %44 {offsets = [0, 64], sizes = [2, 32], strides = [1, 1]} : vector<2x128xf32> to vector<2x32xf32>
    %58 = math.tanh %57 : vector<2x32xf32>
    %59 = vector.extract_strided_slice %44 {offsets = [0, 96], sizes = [2, 32], strides = [1, 1]} : vector<2x128xf32> to vector<2x32xf32>
    %60 = arith.negf %59 : vector<2x32xf32>
    %61 = math.exp %60 : vector<2x32xf32>
    %cst_19 = arith.constant 1.000000e+00 : f32
    %62 = vector.broadcast %cst_19 : f32 to vector<2x32xf32>
    %63 = arith.addf %62, %61 : vector<2x32xf32>
    %64 = arith.divf %62, %63 : vector<2x32xf32>
    %65 = arith.mulf %56, %33 : vector<2x32xf32>
    %66 = arith.mulf %50, %58 : vector<2x32xf32>
    %67 = arith.addf %65, %66 : vector<2x32xf32>
    %68 = math.tanh %67 : vector<2x32xf32>
    %69 = arith.mulf %64, %68 : vector<2x32xf32>
    %c0_20 = arith.constant 0 : index
    %70 = arith.index_cast %c1_i32 : i32 to index
    %c0_21 = arith.constant 0 : index
    %71 = vector.load %arg5[%c0_20, %70, %c0_21] : memref<2x8x32xf32, #tpu.memory_space<vmem>>, vector<2x1x32xf32>
    %72 = vector.shape_cast %71 : vector<2x1x32xf32> to vector<2x32xf32>
    %73 = vector.shape_cast %69 : vector<2x32xf32> to vector<2x1x32xf32>
    tpu.vector_store %arg5[%c0_20, %70, %c0_21], %73 {strides = array<i32>} : memref<2x8x32xf32, #tpu.memory_space<vmem>>, vector<2x1x32xf32>,
    %c2_i32 = arith.constant 2 : i32
    %c0_22 = arith.constant 0 : index
    %74 = arith.index_cast %c2_i32 : i32 to index
    %c0_23 = arith.constant 0 : index
    %75 = vector.load %arg1[%c0_22, %74, %c0_23] : memref<2x8x128xf32, #tpu.memory_space<vmem>>, vector<2x1x128xf32>
    %76 = vector.shape_cast %75 : vector<2x1x128xf32> to vector<2x128xf32>
    %cst_24 = arith.constant dense<0.000000e+00> : vector<2x128xf32>
    %77 = tpu.matmul %69, %3, %cst_24 {dimension_numbers = #tpu.dot_dimension_numbers<[1], [0], [0], [1], [0, 0, 1, 1], [], []>} : vector<2x32xf32>, vector<32x128xf32>, vector<2x128xf32> -> vector<2x128xf32>
    %78 = arith.addf %76, %77 : vector<2x128xf32>
    %79 = vector.extract_strided_slice %78 {offsets = [0, 0], sizes = [2, 32], strides = [1, 1]} : vector<2x128xf32> to vector<2x32xf32>
    %80 = arith.negf %79 : vector<2x32xf32>
    %81 = math.exp %80 : vector<2x32xf32>
    %cst_25 = arith.constant 1.000000e+00 : f32
    %82 = vector.broadcast %cst_25 : f32 to vector<2x32xf32>
    %83 = arith.addf %82, %81 : vector<2x32xf32>
    %84 = arith.divf %82, %83 : vector<2x32xf32>
    %85 = vector.extract_strided_slice %78 {offsets = [0, 32], sizes = [2, 32], strides = [1, 1]} : vector<2x128xf32> to vector<2x32xf32>
    %86 = arith.negf %85 : vector<2x32xf32>
    %87 = math.exp %86 : vector<2x32xf32>
    %cst_26 = arith.constant 1.000000e+00 : f32
    %88 = vector.broadcast %cst_26 : f32 to vector<2x32xf32>
    %89 = arith.addf %88, %87 : vector<2x32xf32>
    %90 = arith.divf %88, %89 : vector<2x32xf32>
    %91 = vector.extract_strided_slice %78 {offsets = [0, 64], sizes = [2, 32], strides = [1, 1]} : vector<2x128xf32> to vector<2x32xf32>
    %92 = math.tanh %91 : vector<2x32xf32>
    %93 = vector.extract_strided_slice %78 {offsets = [0, 96], sizes = [2, 32], strides = [1, 1]} : vector<2x128xf32> to vector<2x32xf32>
    %94 = arith.negf %93 : vector<2x32xf32>
    %95 = math.exp %94 : vector<2x32xf32>
    %cst_27 = arith.constant 1.000000e+00 : f32
    %96 = vector.broadcast %cst_27 : f32 to vector<2x32xf32>
    %97 = arith.addf %96, %95 : vector<2x32xf32>
    %98 = arith.divf %96, %97 : vector<2x32xf32>
    %99 = arith.mulf %90, %67 : vector<2x32xf32>
    %100 = arith.mulf %84, %92 : vector<2x32xf32>
    %101 = arith.addf %99, %100 : vector<2x32xf32>
    %102 = math.tanh %101 : vector<2x32xf32>
    %103 = arith.mulf %98, %102 : vector<2x32xf32>
    %c0_28 = arith.constant 0 : index
    %104 = arith.index_cast %c2_i32 : i32 to index
    %c0_29 = arith.constant 0 : index
    %105 = vector.load %arg5[%c0_28, %104, %c0_29] : memref<2x8x32xf32, #tpu.memory_space<vmem>>, vector<2x1x32xf32>
    %106 = vector.shape_cast %105 : vector<2x1x32xf32> to vector<2x32xf32>
    %107 = vector.shape_cast %103 : vector<2x32xf32> to vector<2x1x32xf32>
    tpu.vector_store %arg5[%c0_28, %104, %c0_29], %107 {strides = array<i32>} : memref<2x8x32xf32, #tpu.memory_space<vmem>>, vector<2x1x32xf32>,
    %c3_i32 = arith.constant 3 : i32
    %c0_30 = arith.constant 0 : index
    %108 = arith.index_cast %c3_i32 : i32 to index
    %c0_31 = arith.constant 0 : index
    %109 = vector.load %arg1[%c0_30, %108, %c0_31] : memref<2x8x128xf32, #tpu.memory_space<vmem>>, vector<2x1x128xf32>
    %110 = vector.shape_cast %109 : vector<2x1x128xf32> to vector<2x128xf32>
    %cst_32 = arith.constant dense<0.000000e+00> : vector<2x128xf32>
    %111 = tpu.matmul %103, %3, %cst_32 {dimension_numbers = #tpu.dot_dimension_numbers<[1], [0], [0], [1], [0, 0, 1, 1], [], []>} : vector<2x32xf32>, vector<32x128xf32>, vector<2x128xf32> -> vector<2x128xf32>
    %112 = arith.addf %110, %111 : vector<2x128xf32>
    %113 = vector.extract_strided_slice %112 {offsets = [0, 0], sizes = [2, 32], strides = [1, 1]} : vector<2x128xf32> to vector<2x32xf32>
    %114 = arith.negf %113 : vector<2x32xf32>
    %115 = math.exp %114 : vector<2x32xf32>
    %cst_33 = arith.constant 1.000000e+00 : f32
    %116 = vector.broadcast %cst_33 : f32 to vector<2x32xf32>
    %117 = arith.addf %116, %115 : vector<2x32xf32>
    %118 = arith.divf %116, %117 : vector<2x32xf32>
    %119 = vector.extract_strided_slice %112 {offsets = [0, 32], sizes = [2, 32], strides = [1, 1]} : vector<2x128xf32> to vector<2x32xf32>
    %120 = arith.negf %119 : vector<2x32xf32>
    %121 = math.exp %120 : vector<2x32xf32>
    %cst_34 = arith.constant 1.000000e+00 : f32
    %122 = vector.broadcast %cst_34 : f32 to vector<2x32xf32>
    %123 = arith.addf %122, %121 : vector<2x32xf32>
    %124 = arith.divf %122, %123 : vector<2x32xf32>
    %125 = vector.extract_strided_slice %112 {offsets = [0, 64], sizes = [2, 32], strides = [1, 1]} : vector<2x128xf32> to vector<2x32xf32>
    %126 = math.tanh %125 : vector<2x32xf32>
    %127 = vector.extract_strided_slice %112 {offsets = [0, 96], sizes = [2, 32], strides = [1, 1]} : vector<2x128xf32> to vector<2x32xf32>
    %128 = arith.negf %127 : vector<2x32xf32>
    %129 = math.exp %128 : vector<2x32xf32>
    %cst_35 = arith.constant 1.000000e+00 : f32
    %130 = vector.broadcast %cst_35 : f32 to vector<2x32xf32>
    %131 = arith.addf %130, %129 : vector<2x32xf32>
    %132 = arith.divf %130, %131 : vector<2x32xf32>
    %133 = arith.mulf %124, %101 : vector<2x32xf32>
    %134 = arith.mulf %118, %126 : vector<2x32xf32>
    %135 = arith.addf %133, %134 : vector<2x32xf32>
    %136 = math.tanh %135 : vector<2x32xf32>
    %137 = arith.mulf %132, %136 : vector<2x32xf32>
    %c0_36 = arith.constant 0 : index
    %138 = arith.index_cast %c3_i32 : i32 to index
    %c0_37 = arith.constant 0 : index
    %139 = vector.load %arg5[%c0_36, %138, %c0_37] : memref<2x8x32xf32, #tpu.memory_space<vmem>>, vector<2x1x32xf32>
    %140 = vector.shape_cast %139 : vector<2x1x32xf32> to vector<2x32xf32>
    %141 = vector.shape_cast %137 : vector<2x32xf32> to vector<2x1x32xf32>
    tpu.vector_store %arg5[%c0_36, %138, %c0_37], %141 {strides = array<i32>} : memref<2x8x32xf32, #tpu.memory_space<vmem>>, vector<2x1x32xf32>,
    %c4_i32 = arith.constant 4 : i32
    %c0_38 = arith.constant 0 : index
    %142 = arith.index_cast %c4_i32 : i32 to index
    %c0_39 = arith.constant 0 : index
    %143 = vector.load %arg1[%c0_38, %142, %c0_39] : memref<2x8x128xf32, #tpu.memory_space<vmem>>, vector<2x1x128xf32>
    %144 = vector.shape_cast %143 : vector<2x1x128xf32> to vector<2x128xf32>
    %cst_40 = arith.constant dense<0.000000e+00> : vector<2x128xf32>
    %145 = tpu.matmul %137, %3, %cst_40 {dimension_numbers = #tpu.dot_dimension_numbers<[1], [0], [0], [1], [0, 0, 1, 1], [], []>} : vector<2x32xf32>, vector<32x128xf32>, vector<2x128xf32> -> vector<2x128xf32>
    %146 = arith.addf %144, %145 : vector<2x128xf32>
    %147 = vector.extract_strided_slice %146 {offsets = [0, 0], sizes = [2, 32], strides = [1, 1]} : vector<2x128xf32> to vector<2x32xf32>
    %148 = arith.negf %147 : vector<2x32xf32>
    %149 = math.exp %148 : vector<2x32xf32>
    %cst_41 = arith.constant 1.000000e+00 : f32
    %150 = vector.broadcast %cst_41 : f32 to vector<2x32xf32>
    %151 = arith.addf %150, %149 : vector<2x32xf32>
    %152 = arith.divf %150, %151 : vector<2x32xf32>
    %153 = vector.extract_strided_slice %146 {offsets = [0, 32], sizes = [2, 32], strides = [1, 1]} : vector<2x128xf32> to vector<2x32xf32>
    %154 = arith.negf %153 : vector<2x32xf32>
    %155 = math.exp %154 : vector<2x32xf32>
    %cst_42 = arith.constant 1.000000e+00 : f32
    %156 = vector.broadcast %cst_42 : f32 to vector<2x32xf32>
    %157 = arith.addf %156, %155 : vector<2x32xf32>
    %158 = arith.divf %156, %157 : vector<2x32xf32>
    %159 = vector.extract_strided_slice %146 {offsets = [0, 64], sizes = [2, 32], strides = [1, 1]} : vector<2x128xf32> to vector<2x32xf32>
    %160 = math.tanh %159 : vector<2x32xf32>
    %161 = vector.extract_strided_slice %146 {offsets = [0, 96], sizes = [2, 32], strides = [1, 1]} : vector<2x128xf32> to vector<2x32xf32>
    %162 = arith.negf %161 : vector<2x32xf32>
    %163 = math.exp %162 : vector<2x32xf32>
    %cst_43 = arith.constant 1.000000e+00 : f32
    %164 = vector.broadcast %cst_43 : f32 to vector<2x32xf32>
    %165 = arith.addf %164, %163 : vector<2x32xf32>
    %166 = arith.divf %164, %165 : vector<2x32xf32>
    %167 = arith.mulf %158, %135 : vector<2x32xf32>
    %168 = arith.mulf %152, %160 : vector<2x32xf32>
    %169 = arith.addf %167, %168 : vector<2x32xf32>
    %170 = math.tanh %169 : vector<2x32xf32>
    %171 = arith.mulf %166, %170 : vector<2x32xf32>
    %c0_44 = arith.constant 0 : index
    %172 = arith.index_cast %c4_i32 : i32 to index
    %c0_45 = arith.constant 0 : index
    %173 = vector.load %arg5[%c0_44, %172, %c0_45] : memref<2x8x32xf32, #tpu.memory_space<vmem>>, vector<2x1x32xf32>
    %174 = vector.shape_cast %173 : vector<2x1x32xf32> to vector<2x32xf32>
    %175 = vector.shape_cast %171 : vector<2x32xf32> to vector<2x1x32xf32>
    tpu.vector_store %arg5[%c0_44, %172, %c0_45], %175 {strides = array<i32>} : memref<2x8x32xf32, #tpu.memory_space<vmem>>, vector<2x1x32xf32>,
    %c5_i32 = arith.constant 5 : i32
    %c0_46 = arith.constant 0 : index
    %176 = arith.index_cast %c5_i32 : i32 to index
    %c0_47 = arith.constant 0 : index
    %177 = vector.load %arg1[%c0_46, %176, %c0_47] : memref<2x8x128xf32, #tpu.memory_space<vmem>>, vector<2x1x128xf32>
    %178 = vector.shape_cast %177 : vector<2x1x128xf32> to vector<2x128xf32>
    %cst_48 = arith.constant dense<0.000000e+00> : vector<2x128xf32>
    %179 = tpu.matmul %171, %3, %cst_48 {dimension_numbers = #tpu.dot_dimension_numbers<[1], [0], [0], [1], [0, 0, 1, 1], [], []>} : vector<2x32xf32>, vector<32x128xf32>, vector<2x128xf32> -> vector<2x128xf32>
    %180 = arith.addf %178, %179 : vector<2x128xf32>
    %181 = vector.extract_strided_slice %180 {offsets = [0, 0], sizes = [2, 32], strides = [1, 1]} : vector<2x128xf32> to vector<2x32xf32>
    %182 = arith.negf %181 : vector<2x32xf32>
    %183 = math.exp %182 : vector<2x32xf32>
    %cst_49 = arith.constant 1.000000e+00 : f32
    %184 = vector.broadcast %cst_49 : f32 to vector<2x32xf32>
    %185 = arith.addf %184, %183 : vector<2x32xf32>
    %186 = arith.divf %184, %185 : vector<2x32xf32>
    %187 = vector.extract_strided_slice %180 {offsets = [0, 32], sizes = [2, 32], strides = [1, 1]} : vector<2x128xf32> to vector<2x32xf32>
    %188 = arith.negf %187 : vector<2x32xf32>
    %189 = math.exp %188 : vector<2x32xf32>
    %cst_50 = arith.constant 1.000000e+00 : f32
    %190 = vector.broadcast %cst_50 : f32 to vector<2x32xf32>
    %191 = arith.addf %190, %189 : vector<2x32xf32>
    %192 = arith.divf %190, %191 : vector<2x32xf32>
    %193 = vector.extract_strided_slice %180 {offsets = [0, 64], sizes = [2, 32], strides = [1, 1]} : vector<2x128xf32> to vector<2x32xf32>
    %194 = math.tanh %193 : vector<2x32xf32>
    %195 = vector.extract_strided_slice %180 {offsets = [0, 96], sizes = [2, 32], strides = [1, 1]} : vector<2x128xf32> to vector<2x32xf32>
    %196 = arith.negf %195 : vector<2x32xf32>
    %197 = math.exp %196 : vector<2x32xf32>
    %cst_51 = arith.constant 1.000000e+00 : f32
    %198 = vector.broadcast %cst_51 : f32 to vector<2x32xf32>
    %199 = arith.addf %198, %197 : vector<2x32xf32>
    %200 = arith.divf %198, %199 : vector<2x32xf32>
    %201 = arith.mulf %192, %169 : vector<2x32xf32>
    %202 = arith.mulf %186, %194 : vector<2x32xf32>
    %203 = arith.addf %201, %202 : vector<2x32xf32>
    %204 = math.tanh %203 : vector<2x32xf32>
    %205 = arith.mulf %200, %204 : vector<2x32xf32>
    %c0_52 = arith.constant 0 : index
    %206 = arith.index_cast %c5_i32 : i32 to index
    %c0_53 = arith.constant 0 : index
    %207 = vector.load %arg5[%c0_52, %206, %c0_53] : memref<2x8x32xf32, #tpu.memory_space<vmem>>, vector<2x1x32xf32>
    %208 = vector.shape_cast %207 : vector<2x1x32xf32> to vector<2x32xf32>
    %209 = vector.shape_cast %205 : vector<2x32xf32> to vector<2x1x32xf32>
    tpu.vector_store %arg5[%c0_52, %206, %c0_53], %209 {strides = array<i32>} : memref<2x8x32xf32, #tpu.memory_space<vmem>>, vector<2x1x32xf32>,
    %c6_i32 = arith.constant 6 : i32
    %c0_54 = arith.constant 0 : index
    %210 = arith.index_cast %c6_i32 : i32 to index
    %c0_55 = arith.constant 0 : index
    %211 = vector.load %arg1[%c0_54, %210, %c0_55] : memref<2x8x128xf32, #tpu.memory_space<vmem>>, vector<2x1x128xf32>
    %212 = vector.shape_cast %211 : vector<2x1x128xf32> to vector<2x128xf32>
    %cst_56 = arith.constant dense<0.000000e+00> : vector<2x128xf32>
    %213 = tpu.matmul %205, %3, %cst_56 {dimension_numbers = #tpu.dot_dimension_numbers<[1], [0], [0], [1], [0, 0, 1, 1], [], []>} : vector<2x32xf32>, vector<32x128xf32>, vector<2x128xf32> -> vector<2x128xf32>
    %214 = arith.addf %212, %213 : vector<2x128xf32>
    %215 = vector.extract_strided_slice %214 {offsets = [0, 0], sizes = [2, 32], strides = [1, 1]} : vector<2x128xf32> to vector<2x32xf32>
    %216 = arith.negf %215 : vector<2x32xf32>
    %217 = math.exp %216 : vector<2x32xf32>
    %cst_57 = arith.constant 1.000000e+00 : f32
    %218 = vector.broadcast %cst_57 : f32 to vector<2x32xf32>
    %219 = arith.addf %218, %217 : vector<2x32xf32>
    %220 = arith.divf %218, %219 : vector<2x32xf32>
    %221 = vector.extract_strided_slice %214 {offsets = [0, 32], sizes = [2, 32], strides = [1, 1]} : vector<2x128xf32> to vector<2x32xf32>
    %222 = arith.negf %221 : vector<2x32xf32>
    %223 = math.exp %222 : vector<2x32xf32>
    %cst_58 = arith.constant 1.000000e+00 : f32
    %224 = vector.broadcast %cst_58 : f32 to vector<2x32xf32>
    %225 = arith.addf %224, %223 : vector<2x32xf32>
    %226 = arith.divf %224, %225 : vector<2x32xf32>
    %227 = vector.extract_strided_slice %214 {offsets = [0, 64], sizes = [2, 32], strides = [1, 1]} : vector<2x128xf32> to vector<2x32xf32>
    %228 = math.tanh %227 : vector<2x32xf32>
    %229 = vector.extract_strided_slice %214 {offsets = [0, 96], sizes = [2, 32], strides = [1, 1]} : vector<2x128xf32> to vector<2x32xf32>
    %230 = arith.negf %229 : vector<2x32xf32>
    %231 = math.exp %230 : vector<2x32xf32>
    %cst_59 = arith.constant 1.000000e+00 : f32
    %232 = vector.broadcast %cst_59 : f32 to vector<2x32xf32>
    %233 = arith.addf %232, %231 : vector<2x32xf32>
    %234 = arith.divf %232, %233 : vector<2x32xf32>
    %235 = arith.mulf %226, %203 : vector<2x32xf32>
    %236 = arith.mulf %220, %228 : vector<2x32xf32>
    %237 = arith.addf %235, %236 : vector<2x32xf32>
    %238 = math.tanh %237 : vector<2x32xf32>
    %239 = arith.mulf %234, %238 : vector<2x32xf32>
    %c0_60 = arith.constant 0 : index
    %240 = arith.index_cast %c6_i32 : i32 to index
    %c0_61 = arith.constant 0 : index
    %241 = vector.load %arg5[%c0_60, %240, %c0_61] : memref<2x8x32xf32, #tpu.memory_space<vmem>>, vector<2x1x32xf32>
    %242 = vector.shape_cast %241 : vector<2x1x32xf32> to vector<2x32xf32>
    %243 = vector.shape_cast %239 : vector<2x32xf32> to vector<2x1x32xf32>
    tpu.vector_store %arg5[%c0_60, %240, %c0_61], %243 {strides = array<i32>} : memref<2x8x32xf32, #tpu.memory_space<vmem>>, vector<2x1x32xf32>,
    %c7_i32 = arith.constant 7 : i32
    %c0_62 = arith.constant 0 : index
    %244 = arith.index_cast %c7_i32 : i32 to index
    %c0_63 = arith.constant 0 : index
    %245 = vector.load %arg1[%c0_62, %244, %c0_63] : memref<2x8x128xf32, #tpu.memory_space<vmem>>, vector<2x1x128xf32>
    %246 = vector.shape_cast %245 : vector<2x1x128xf32> to vector<2x128xf32>
    %cst_64 = arith.constant dense<0.000000e+00> : vector<2x128xf32>
    %247 = tpu.matmul %239, %3, %cst_64 {dimension_numbers = #tpu.dot_dimension_numbers<[1], [0], [0], [1], [0, 0, 1, 1], [], []>} : vector<2x32xf32>, vector<32x128xf32>, vector<2x128xf32> -> vector<2x128xf32>
    %248 = arith.addf %246, %247 : vector<2x128xf32>
    %249 = vector.extract_strided_slice %248 {offsets = [0, 0], sizes = [2, 32], strides = [1, 1]} : vector<2x128xf32> to vector<2x32xf32>
    %250 = arith.negf %249 : vector<2x32xf32>
    %251 = math.exp %250 : vector<2x32xf32>
    %cst_65 = arith.constant 1.000000e+00 : f32
    %252 = vector.broadcast %cst_65 : f32 to vector<2x32xf32>
    %253 = arith.addf %252, %251 : vector<2x32xf32>
    %254 = arith.divf %252, %253 : vector<2x32xf32>
    %255 = vector.extract_strided_slice %248 {offsets = [0, 32], sizes = [2, 32], strides = [1, 1]} : vector<2x128xf32> to vector<2x32xf32>
    %256 = arith.negf %255 : vector<2x32xf32>
    %257 = math.exp %256 : vector<2x32xf32>
    %cst_66 = arith.constant 1.000000e+00 : f32
    %258 = vector.broadcast %cst_66 : f32 to vector<2x32xf32>
    %259 = arith.addf %258, %257 : vector<2x32xf32>
    %260 = arith.divf %258, %259 : vector<2x32xf32>
    %261 = vector.extract_strided_slice %248 {offsets = [0, 64], sizes = [2, 32], strides = [1, 1]} : vector<2x128xf32> to vector<2x32xf32>
    %262 = math.tanh %261 : vector<2x32xf32>
    %263 = vector.extract_strided_slice %248 {offsets = [0, 96], sizes = [2, 32], strides = [1, 1]} : vector<2x128xf32> to vector<2x32xf32>
    %264 = arith.negf %263 : vector<2x32xf32>
    %265 = math.exp %264 : vector<2x32xf32>
    %cst_67 = arith.constant 1.000000e+00 : f32
    %266 = vector.broadcast %cst_67 : f32 to vector<2x32xf32>
    %267 = arith.addf %266, %265 : vector<2x32xf32>
    %268 = arith.divf %266, %267 : vector<2x32xf32>
    %269 = arith.mulf %260, %237 : vector<2x32xf32>
    %270 = arith.mulf %254, %262 : vector<2x32xf32>
    %271 = arith.addf %269, %270 : vector<2x32xf32>
    %272 = math.tanh %271 : vector<2x32xf32>
    %273 = arith.mulf %268, %272 : vector<2x32xf32>
    %c0_68 = arith.constant 0 : index
    %274 = arith.index_cast %c7_i32 : i32 to index
    %c0_69 = arith.constant 0 : index
    %275 = vector.load %arg5[%c0_68, %274, %c0_69] : memref<2x8x32xf32, #tpu.memory_space<vmem>>, vector<2x1x32xf32>
    %276 = vector.shape_cast %275 : vector<2x1x32xf32> to vector<2x32xf32>
    %277 = vector.shape_cast %273 : vector<2x32xf32> to vector<2x1x32xf32>
    tpu.vector_store %arg5[%c0_68, %274, %c0_69], %277 {strides = array<i32>} : memref<2x8x32xf32, #tpu.memory_space<vmem>>, vector<2x1x32xf32>,
    %c8_i32 = arith.constant 8 : i32
    %c0_70 = arith.constant 0 : index
    %c0_71 = arith.constant 0 : index
    %278 = vector.load %arg8[%c0_70, %c0_71] : memref<2x32xf32, #tpu.memory_space<vmem>>, vector<2x32xf32>
    tpu.vector_store %arg8[%c0_70, %c0_71], %273 {strides = array<i32>} : memref<2x32xf32, #tpu.memory_space<vmem>>, vector<2x32xf32>,
    %c0_72 = arith.constant 0 : index
    %c0_73 = arith.constant 0 : index
    %279 = vector.load %arg9[%c0_72, %c0_73] : memref<2x32xf32, #tpu.memory_space<vmem>>, vector<2x32xf32>
    tpu.vector_store %arg9[%c0_72, %c0_73], %271 {strides = array<i32>} : memref<2x32xf32, #tpu.memory_space<vmem>>, vector<2x32xf32>,
    %c0_i32_74 = arith.constant 0 : i32
    %280 = arith.cmpi eq, %arg0, %c0_i32_74 : i32
    %281 = arith.extui %280 : i1 to i32
    %c0_i32_75 = arith.constant 0 : i32
    %282 = arith.cmpi ne, %281, %c0_i32_75 : i32
    scf.if %282 {
      %c0_76 = arith.constant 0 : index
      %c0_77 = arith.constant 0 : index
      %283 = vector.load %arg6[%c0_76, %c0_77] : memref<2x32xf32, #tpu.memory_space<vmem>>, vector<2x32xf32>
      tpu.vector_store %arg6[%c0_76, %c0_77], %273 {strides = array<i32>} : memref<2x32xf32, #tpu.memory_space<vmem>>, vector<2x32xf32>,
      %c0_78 = arith.constant 0 : index
      %c0_79 = arith.constant 0 : index
      %284 = vector.load %arg7[%c0_78, %c0_79] : memref<2x32xf32, #tpu.memory_space<vmem>>, vector<2x32xf32>
      tpu.vector_store %arg7[%c0_78, %c0_79], %271 {strides = array<i32>} : memref<2x32xf32, #tpu.memory_space<vmem>>, vector<2x32xf32>,
    } else {
    }
    return
  }
  func.func @transform_0(%arg0: i32) -> (i32, i32, i32) {
    %c0_i32 = arith.constant 0 : i32
    %c0_i32_0 = arith.constant 0 : i32
    %c0_i32_1 = arith.constant 0 : i32
    return %c0_i32, %arg0, %c0_i32_0 : i32, i32, i32
  }
  func.func @transform_1(%arg0: i32) -> (i32, i32) {
    %c0_i32 = arith.constant 0 : i32
    %c0_i32_0 = arith.constant 0 : i32
    %c0_i32_1 = arith.constant 0 : i32
    return %c0_i32, %c0_i32_0 : i32, i32
  }
  func.func @transform_2(%arg0: i32) -> (i32, i32) {
    %c0_i32 = arith.constant 0 : i32
    %c0_i32_0 = arith.constant 0 : i32
    %c0_i32_1 = arith.constant 0 : i32
    return %c0_i32, %c0_i32_0 : i32, i32
  }
  func.func @transform_3(%arg0: i32) -> (i32, i32) {
    %c0_i32 = arith.constant 0 : i32
    %c0_i32_0 = arith.constant 0 : i32
    %c0_i32_1 = arith.constant 0 : i32
    return %c0_i32, %c0_i32_0 : i32, i32
  }
  func.func @transform_4(%arg0: i32) -> (i32, i32, i32) {
    %c0_i32 = arith.constant 0 : i32
    %c0_i32_0 = arith.constant 0 : i32
    %c0_i32_1 = arith.constant 0 : i32
    return %c0_i32, %arg0, %c0_i32_0 : i32, i32, i32
  }
  func.func @transform_5(%arg0: i32) -> (i32, i32) {
    %c0_i32 = arith.constant 0 : i32
    %c0_i32_0 = arith.constant 0 : i32
    %c0_i32_1 = arith.constant 0 : i32
    return %c0_i32, %c0_i32_0 : i32, i32
  }
  func.func @transform_6(%arg0: i32) -> (i32, i32) {
    %c0_i32 = arith.constant 0 : i32
    %c0_i32_0 = arith.constant 0 : i32
    %c0_i32_1 = arith.constant 0 : i32
    return %c0_i32, %c0_i32_0 : i32, i32
  }
}

</mosaic_0001>

<llo_original>
// kernel: tpu_custom_call.1
$region0: #{tpu_custom_call.1}
  #allocation0 [shape = 'u32[]', space=smem, size = 0x4, offset = 0x4, fixed_abs, tag = 'smem constant byte address 0x4 - core index']
  #allocation1 [shape = 'u32[72,128]{1,0:T(1,128)}', space=vmem, size = 0x9000, scoped, tag = 'internal scratch']
  #allocation2 [shape = 'f32[2,32]{1,0:T(2,128)}', space=vmem, size = 0x400, scoped, tag = 'scratch operand']
  #allocation3 [shape = 'f32[2,32]{1,0:T(2,128)}', space=vmem, size = 0x400, scoped, tag = 'scratch operand']
  %s0 = inlined_call_operand.hbm [shape: f32[2,8,128], index: 0, kind: input, shape index: {}]
  %s1 = inlined_call_operand.hbm [shape: f32[32,128], index: 1, kind: input, shape index: {}]
  %s2 = inlined_call_operand.hbm [shape: f32[2,32], index: 2, kind: input, shape index: {}]
  %s3 = inlined_call_operand.vmem [shape: f32[2,32], index: 3, kind: input, shape index: {}]
  %s4 = inlined_call_operand.hbm [shape: f32[2,8,32], index: 4, kind: output, shape index: {0}]
  %s5 = inlined_call_operand.hbm [shape: f32[2,32], index: 5, kind: output, shape index: {1}]
  %s6 = inlined_call_operand.hbm [shape: f32[2,32], index: 6, kind: output, shape index: {2}]
  %7 = xla_tuple %s4, %s5, %s6
  %s8 = sld [smem:[#allocation0]]
  $region62: #{tpu_custom_call.1} parent=0
    _
  %s10 = ssub.s32 1, %s8
  %s11 = scalar_select 0, %s10, %s8
  $region1: #{tpu_custom_call.1} parent=0
    #allocation4 [shape = 'u8[8192]{0}', space=vmem, size = 0x2000, scoped, tag = 'input window, operand 0, single buffered']
    #allocation5 [shape = 's32[1]{0}', space=sflag, size = 0x4, scoped, tag = 'scoped memory for tpu_custom_call.1']
    #allocation6 [shape = 's32[1]{0}', space=sflag, size = 0x4, scoped, tag = 'scoped memory for tpu_custom_call.1']
    #allocation7 [shape = 'u8[16384]{0}', space=vmem, size = 0x4000, scoped, tag = 'input window, operand 1, single buffered']
    #allocation8 [shape = 's32[1]{0}', space=sflag, size = 0x4, scoped, tag = 'scoped memory for tpu_custom_call.1']
    #allocation9 [shape = 'u8[1024]{0}', space=vmem, size = 0x400, scoped, tag = 'input window, operand 2, single buffered']
    #allocation10 [shape = 'u8[8192]{0}', space=vmem, size = 0x2000, scoped, tag = 'output window, operand 0, single buffered']
    #allocation11 [shape = 'u8[1024]{0}', space=vmem, size = 0x400, scoped, tag = 'output window, operand 1, single buffered']
    #allocation12 [shape = 's32[1]{0}', space=sflag, size = 0x4, scoped, tag = 'scoped memory for tpu_custom_call.1']
    #allocation13 [shape = 'u8[1024]{0}', space=vmem, size = 0x400, scoped, tag = 'output window, operand 2, single buffered']
    %12 = vsyncpa [#allocation5], 0
    %13 = vsyncpa [#allocation8], 0
    %14 = vsyncpa [#allocation6], 0
    %15 = vsyncpa [#allocation12], 0
    // Predicated region
    $region2: #{tpu_custom_call.1} parent=1 // pred_check
      _
    $region3: #{tpu_custom_call.1} parent=1 // pred_check_branch
      %17 = sbr.rel (0) target = $region5
    $region4: #{tpu_custom_call.1} parent=1 // pred_region
      %19 = vsyncadd [#allocation5], 0
      %s20 = sshll.u32 %s0, 4
      %s21 = int_to_ptr.hbm [resolvable:$true] %s20
      %s22 = sshll.u32 [#allocation4], 4
      %s23 = int_to_ptr.vmem [resolvable:$true] %s22
      %28 = dma.hbm_to_vmem [thread:$0]  %s21, 256, %s23, [#allocation5], 128, 128, 8
    $region5: #{tpu_custom_call.1} parent=1 // pred_fallthru
      _
    // Predicated region
    $region6: #{tpu_custom_call.1} parent=1 // pred_check
      _
    $region7: #{tpu_custom_call.1} parent=1 // pred_check_branch
      %30 = sbr.rel (0) target = $region9
    $region8: #{tpu_custom_call.1} parent=1 // pred_region
      %32 = vsyncadd [#allocation8], 0
      %s33 = sshll.u32 %s1, 4
      %s34 = int_to_ptr.hbm [resolvable:$true] %s33
      %s35 = sshll.u32 [#allocation7], 4
      %s36 = int_to_ptr.vmem [resolvable:$true] %s35
      %41 = dma.hbm_to_vmem [thread:$0]  %s34, 512, %s36, [#allocation8], 128, 128, 8
    $region9: #{tpu_custom_call.1} parent=1 // pred_fallthru
      _
    // Predicated region
    $region10: #{tpu_custom_call.1} parent=1 // pred_check
      _
    $region11: #{tpu_custom_call.1} parent=1 // pred_check_branch
      %43 = sbr.rel (0) target = $region13
    $region12: #{tpu_custom_call.1} parent=1 // pred_region
      %45 = vsyncadd [#allocation8], 0
      %s47 = sshll.u32 %s2, 4
      %s48 = int_to_ptr.hbm [resolvable:$true] %s47
      %s49 = sshll.u32 [#allocation9], 4
      %s50 = int_to_ptr.vmem [resolvable:$true] %s49
      %52 = dma.hbm_to_vmem [thread:$0]  %s48, 32, %s50, [#allocation8]
    $region13: #{tpu_custom_call.1} parent=1 // pred_fallthru
      _
    // Predicated region
    $region14: #{tpu_custom_call.1} parent=1 // pred_check
      _
    $region15: #{tpu_custom_call.1} parent=1 // pred_check_branch
      %54 = sbr.rel (0) target = $region17
    $region16: #{tpu_custom_call.1} parent=1 // pred_region
      _
    $region17: #{tpu_custom_call.1} parent=1 // pred_fallthru
      _
    // Predicated region
    $region18: #{tpu_custom_call.1} parent=1 // pred_check
      _
    $region19: #{tpu_custom_call.1} parent=1 // pred_check_branch
      %56 = sbr.rel (0) target = $region21
    $region20: #{tpu_custom_call.1} parent=1 // pred_region
      %58 = dma.done [#allocation5], 256
    $region21: #{tpu_custom_call.1} parent=1 // pred_fallthru
      _
    // Predicated region
    $region22: #{tpu_custom_call.1} parent=1 // pred_check
      _
    $region23: #{tpu_custom_call.1} parent=1 // pred_check_branch
      %60 = sbr.rel (0) target = $region25
    $region24: #{tpu_custom_call.1} parent=1 // pred_region
      %62 = dma.done [#allocation8], 512
    $region25: #{tpu_custom_call.1} parent=1 // pred_fallthru
      _
    // Predicated region
    $region26: #{tpu_custom_call.1} parent=1 // pred_check
      _
    $region27: #{tpu_custom_call.1} parent=1 // pred_check_branch
      %64 = sbr.rel (0) target = $region29
    $region28: #{tpu_custom_call.1} parent=1 // pred_region
      %66 = dma.done [#allocation8], 32
    $region29: #{tpu_custom_call.1} parent=1 // pred_fallthru
      _
    %p67 = scmp.eq.s32.totalorder 0, 0
    // Predicated region
    $region30: #{tpu_custom_call.1} parent=1 // pred_check
      %p68 = pneg %p67
    $region31: #{tpu_custom_call.1} parent=1 // pred_check_branch
      %70 = sbr.rel (%p68) target = $region33
    $region32: #{tpu_custom_call.1} parent=1 // pred_region
      %v71 = vld [vmem:[#allocation9] sm:$0x3]
      %vm72 = vcmask 254976
      %73 = vst.msk [vmem:[#allocation2] sm:$0x3] %vm72, %v71
      %v74 = vld [vmem:[%s3] sm:$0x3]
      %75 = vst.msk [vmem:[#allocation3] sm:$0x3] %vm72, %v74
    $region33: #{tpu_custom_call.1} parent=1 // pred_fallthru
      _
    %v76 = vld [vmem:[#allocation7] sm:$0xff]
    %v77 = vld [vmem:[#allocation7 + $0x8] sm:$0xff]
    %v78 = vld [vmem:[#allocation7 + $0x10] sm:$0xff]
    %v79 = vld [vmem:[#allocation7 + $0x18] sm:$0xff]
    %v80 = vld [vmem:[#allocation2] sm:$0x3]
    %v81 = vld [vmem:[#allocation3] sm:$0x3]
    %v82 = vld [vmem:[#allocation4] sm:$0x1]
    %v83 = vld [vmem:[#allocation4 + $0x8] sm:$0x1]
    %vm84 = vcmask 261120
    %v86 = vsel %vm84, %v80, 0
    %88 = vmatpush.msra.mxu0 0.0
    %89 = vmatpush.msra.mxu0 0.0
    %90 = vmatpush.msra.mxu0 0.0
    %91 = vmatpush.msra.mxu0 0.0
    %92 = vmatpush.msra.mxu0 0.0
    %93 = vmatpush.msra.mxu0 0.0
    %94 = vmatpush.msra.mxu0 0.0
    %95 = vmatpush.msra.mxu0 0.0
    %96 = vmatpush.msra.mxu0 0.0
    %97 = vmatpush.msra.mxu0 0.0
    %98 = vmatpush.msra.mxu0 0.0
    %99 = vmatpush.msra.mxu0 0.0
    %100 = vmatpush.msra.mxu0 %v79
    %101 = vmatpush.msra.mxu0 %v78
    %102 = vmatpush.msra.mxu0 %v77
    %103 = vmatpush.msra.mxu0 %v76
    %104 = vmatmul.f32.gmra.mxu0 %v86
    %v105 = vpop.f32.mrf.mxu0
    %v106 = vadd.f32 0.0, %v105
    %107 = vdwg.mxu0
    %v109 = vrot.slane %v106, 1
    %v112 = vadd.f32 %v82, %v106
    %v113 = vadd.f32 %v83, %v109
    %v114 = vxor.u32 %v112, 2147483648
    %v115 = vxor.u32 %v113, 2147483648
    %v116 = vmul.f32 %v114, 1.442695
    %v117 = vpow.pop %v116
    %v118 = vmul.f32 %v115, 1.442695
    %v119 = vpow.pop %v118
    %v120 = vadd.f32 %v117, 1.0
    %v121 = vadd.f32 %v119, 1.0
    %v122 = vrcp.pop %v120
    %v123 = vmul.f32 %v120, %v122
    %v124 = vsub.f32 1.0, %v123
    %v125 = vmul.f32 %v122, %v124
    %v126 = vadd.f32 %v122, %v125
    %vm127 = vweird.f32 %v120
    %vm128 = vweird.f32 %v122
    %vm129 = vmor %vm127, %vm128
    %v130 = vsel %vm129, %v122, %v126
    %v131 = vand.u32 2147483647, %v120
    %vm132 = vcmp.eq.f32.partialorder %v131, 8.507059e+37
    %v133 = vand.u32 %v120, 2147483648
    %v134 = vor.u32 1.1754944e-38, %v133
    %v135 = vsel %vm132, %v134, %v130
    %v136 = vmul.f32 1.0, %v135
    %v137 = vrcp.pop %v121
    %v138 = vmul.f32 %v121, %v137
    %v139 = vsub.f32 1.0, %v138
    %v140 = vmul.f32 %v137, %v139
    %v141 = vadd.f32 %v137, %v140
    %vm142 = vweird.f32 %v121
    %vm143 = vweird.f32 %v137
    %vm144 = vmor %vm142, %vm143
    %v145 = vsel %vm144, %v137, %v141
    %v146 = vand.u32 2147483647, %v121
    %vm147 = vcmp.eq.f32.partialorder %v146, 8.507059e+37
    %v148 = vand.u32 %v121, 2147483648
    %v149 = vor.u32 1.1754944e-38, %v148
    %v150 = vsel %vm147, %v149, %v145
    %v151 = vmul.f32 1.0, %v150
    %v152 = vtanh.pop %v112
    %v153 = vtanh.pop %v113
    %v155 = vrot.slane %v81, 1
    %156 = vrot.lane.b32.xlu0 %v81, 32
    %v157 = vpop.permute.xlu0 %156
    %158 = vrot.lane.b32.xlu0 %v155, 32
    %v159 = vpop.permute.xlu0 %158
    %v162 = vmul.f32 %v136, %v157
    %v163 = vmul.f32 %v151, %v159
    %166 = vrot.lane.b32.xlu0 %v152, 64
    %v167 = vpop.permute.xlu0 %166
    %168 = vrot.lane.b32.xlu0 %v153, 64
    %v169 = vpop.permute.xlu0 %168
    %v172 = vmul.f32 %v136, %v167
    %v173 = vmul.f32 %v151, %v169
    %176 = vrot.lane.b32.xlu0 %v172, 32
    %v177 = vpop.permute.xlu0 %176
    %178 = vrot.lane.b32.xlu0 %v173, 32
    %v179 = vpop.permute.xlu0 %178
    %v182 = vadd.f32 %v162, %v177
    %v183 = vadd.f32 %v163, %v179
    %v184 = vtanh.pop %v182
    %v185 = vtanh.pop %v183
    %188 = vrot.lane.b32.xlu0 %v184, 64
    %v189 = vpop.permute.xlu0 %188
    %190 = vrot.lane.b32.xlu0 %v185, 64
    %v191 = vpop.permute.xlu0 %190
    %v194 = vmul.f32 %v136, %v189
    %v195 = vmul.f32 %v151, %v191
    %198 = vrot.lane.b32.xlu0 %v194, 32
    %v199 = vpop.permute.xlu0 %198
    %200 = vrot.lane.b32.xlu0 %v195, 32
    %v201 = vpop.permute.xlu0 %200
    %vm204 = vcmask 253952
    %205 = vst.msk [vmem:[#allocation10] sm:$0x1] %vm204, %v199
    %206 = vst.msk [vmem:[#allocation10 + $0x8] sm:$0x1] %vm204, %v201
    %v207 = vld [vmem:[#allocation4 + $0x1] sm:$0x1]
    %v208 = vld [vmem:[#allocation4 + $0x9] sm:$0x1]
    %v209 = vrot.slane %v195, 7
    %vm210 = vcmask 1041409
    %v211 = vsel %vm210, %v209, %v194
    %212 = vrot.lane.b32.xlu0 %v211, 32
    %v213 = vpop.permute.xlu0 %212
    %v214 = vsel %vm84, %v213, 0
    %216 = vmatpush.msra.mxu0 0.0
    %217 = vmatpush.msra.mxu0 0.0
    %218 = vmatpush.msra.mxu0 0.0
    %219 = vmatpush.msra.mxu0 0.0
    %220 = vmatpush.msra.mxu0 0.0
    %221 = vmatpush.msra.mxu0 0.0
    %222 = vmatpush.msra.mxu0 0.0
    %223 = vmatpush.msra.mxu0 0.0
    %224 = vmatpush.msra.mxu0 0.0
    %225 = vmatpush.msra.mxu0 0.0
    %226 = vmatpush.msra.mxu0 0.0
    %227 = vmatpush.msra.mxu0 0.0
    %228 = vmatpush.msra.mxu0 %v79
    %229 = vmatpush.msra.mxu0 %v78
    %230 = vmatpush.msra.mxu0 %v77
    %231 = vmatpush.msra.mxu0 %v76
    %232 = vmatmul.f32.gmra.mxu0 %v214
    %v233 = vpop.f32.mrf.mxu0
    %v234 = vadd.f32 0.0, %v233
    %235 = vdwg.mxu0
    %v237 = vrot.slane %v234, 1
    %v240 = vadd.f32 %v207, %v234
    %v241 = vadd.f32 %v208, %v237
    %v242 = vxor.u32 %v240, 2147483648
    %v243 = vxor.u32 %v241, 2147483648
    %v244 = vmul.f32 %v242, 1.442695
    %v245 = vpow.pop %v244
    %v246 = vmul.f32 %v243, 1.442695
    %v247 = vpow.pop %v246
    %v248 = vadd.f32 %v245, 1.0
    %v249 = vadd.f32 %v247, 1.0
    %v250 = vrcp.pop %v248
    %v251 = vmul.f32 %v248, %v250
    %v252 = vsub.f32 1.0, %v251
    %v253 = vmul.f32 %v250, %v252
    %v254 = vadd.f32 %v250, %v253
    %vm255 = vweird.f32 %v248
    %vm256 = vweird.f32 %v250
    %vm257 = vmor %vm255, %vm256
    %v258 = vsel %vm257, %v250, %v254
    %v259 = vand.u32 2147483647, %v248
    %vm260 = vcmp.eq.f32.partialorder %v259, 8.507059e+37
    %v261 = vand.u32 %v248, 2147483648
    %v262 = vor.u32 1.1754944e-38, %v261
    %v263 = vsel %vm260, %v262, %v258
    %v264 = vmul.f32 1.0, %v263
    %v265 = vrcp.pop %v249
    %v266 = vmul.f32 %v249, %v265
    %v267 = vsub.f32 1.0, %v266
    %v268 = vmul.f32 %v265, %v267
    %v269 = vadd.f32 %v265, %v268
    %vm270 = vweird.f32 %v249
    %vm271 = vweird.f32 %v265
    %vm272 = vmor %vm270, %vm271
    %v273 = vsel %vm272, %v265, %v269
    %v274 = vand.u32 2147483647, %v249
    %vm275 = vcmp.eq.f32.partialorder %v274, 8.507059e+37
    %v276 = vand.u32 %v249, 2147483648
    %v277 = vor.u32 1.1754944e-38, %v276
    %v278 = vsel %vm275, %v277, %v273
    %v279 = vmul.f32 1.0, %v278
    %v280 = vtanh.pop %v240
    %v281 = vtanh.pop %v241
    %v282 = vmul.f32 %v264, %v182
    %v283 = vmul.f32 %v279, %v183
    %286 = vrot.lane.b32.xlu0 %v280, 64
    %v287 = vpop.permute.xlu0 %286
    %288 = vrot.lane.b32.xlu0 %v281, 64
    %v289 = vpop.permute.xlu0 %288
    %v292 = vmul.f32 %v264, %v287
    %v293 = vmul.f32 %v279, %v289
    %296 = vrot.lane.b32.xlu0 %v292, 32
    %v297 = vpop.permute.xlu0 %296
    %298 = vrot.lane.b32.xlu0 %v293, 32
    %v299 = vpop.permute.xlu0 %298
    %v302 = vadd.f32 %v282, %v297
    %v303 = vadd.f32 %v283, %v299
    %v304 = vtanh.pop %v302
    %v305 = vtanh.pop %v303
    %308 = vrot.lane.b32.xlu0 %v304, 64
    %v309 = vpop.permute.xlu0 %308
    %310 = vrot.lane.b32.xlu0 %v305, 64
    %v311 = vpop.permute.xlu0 %310
    %v314 = vmul.f32 %v264, %v309
    %v315 = vmul.f32 %v279, %v311
    %318 = vrot.lane.b32.xlu0 %v314, 32
    %v319 = vpop.permute.xlu0 %318
    %320 = vrot.lane.b32.xlu0 %v315, 32
    %v321 = vpop.permute.xlu0 %320
    %324 = vst.msk [vmem:[#allocation10 + $0x1] sm:$0x1] %vm204, %v319
    %325 = vst.msk [vmem:[#allocation10 + $0x9] sm:$0x1] %vm204, %v321
    %v326 = vld [vmem:[#allocation4 + $0x2] sm:$0x1]
    %v327 = vld [vmem:[#allocation4 + $0xa] sm:$0x1]
    %v328 = vrot.slane %v315, 7
    %v329 = vsel %vm210, %v328, %v314
    %330 = vrot.lane.b32.xlu0 %v329, 32
    %v331 = vpop.permute.xlu0 %330
    %v332 = vsel %vm84, %v331, 0
    %334 = vmatpush.msra.mxu0 0.0
    %335 = vmatpush.msra.mxu0 0.0
    %336 = vmatpush.msra.mxu0 0.0
    %337 = vmatpush.msra.mxu0 0.0
    %338 = vmatpush.msra.mxu0 0.0
    %339 = vmatpush.msra.mxu0 0.0
    %340 = vmatpush.msra.mxu0 0.0
    %341 = vmatpush.msra.mxu0 0.0
    %342 = vmatpush.msra.mxu0 0.0
    %343 = vmatpush.msra.mxu0 0.0
    %344 = vmatpush.msra.mxu0 0.0
    %345 = vmatpush.msra.mxu0 0.0
    %346 = vmatpush.msra.mxu0 %v79
    %347 = vmatpush.msra.mxu0 %v78
    %348 = vmatpush.msra.mxu0 %v77
    %349 = vmatpush.msra.mxu0 %v76
    %350 = vmatmul.f32.gmra.mxu0 %v332
    %v351 = vpop.f32.mrf.mxu0
    %v352 = vadd.f32 0.0, %v351
    %353 = vdwg.mxu0
    %v355 = vrot.slane %v352, 1
    %v358 = vadd.f32 %v326, %v352
    %v359 = vadd.f32 %v327, %v355
    %v360 = vxor.u32 %v358, 2147483648
    %v361 = vxor.u32 %v359, 2147483648
    %v362 = vmul.f32 %v360, 1.442695
    %v363 = vpow.pop %v362
    %v364 = vmul.f32 %v361, 1.442695
    %v365 = vpow.pop %v364
    %v366 = vadd.f32 %v363, 1.0
    %v367 = vadd.f32 %v365, 1.0
    %v368 = vrcp.pop %v366
    %v369 = vmul.f32 %v366, %v368
    %v370 = vsub.f32 1.0, %v369
    %v371 = vmul.f32 %v368, %v370
    %v372 = vadd.f32 %v368, %v371
    %vm373 = vweird.f32 %v366
    %vm374 = vweird.f32 %v368
    %vm375 = vmor %vm373, %vm374
    %v376 = vsel %vm375, %v368, %v372
    %v377 = vand.u32 2147483647, %v366
    %vm378 = vcmp.eq.f32.partialorder %v377, 8.507059e+37
    %v379 = vand.u32 %v366, 2147483648
    %v380 = vor.u32 1.1754944e-38, %v379
    %v381 = vsel %vm378, %v380, %v376
    %v382 = vmul.f32 1.0, %v381
    %v383 = vrcp.pop %v367
    %v384 = vmul.f32 %v367, %v383
    %v385 = vsub.f32 1.0, %v384
    %v386 = vmul.f32 %v383, %v385
    %v387 = vadd.f32 %v383, %v386
    %vm388 = vweird.f32 %v367
    %vm389 = vweird.f32 %v383
    %vm390 = vmor %vm388, %vm389
    %v391 = vsel %vm390, %v383, %v387
    %v392 = vand.u32 2147483647, %v367
    %vm393 = vcmp.eq.f32.partialorder %v392, 8.507059e+37
    %v394 = vand.u32 %v367, 2147483648
    %v395 = vor.u32 1.1754944e-38, %v394
    %v396 = vsel %vm393, %v395, %v391
    %v397 = vmul.f32 1.0, %v396
    %v398 = vtanh.pop %v358
    %v399 = vtanh.pop %v359
    %v400 = vmul.f32 %v382, %v302
    %v401 = vmul.f32 %v397, %v303
    %404 = vrot.lane.b32.xlu0 %v398, 64
    %v405 = vpop.permute.xlu0 %404
    %406 = vrot.lane.b32.xlu0 %v399, 64
    %v407 = vpop.permute.xlu0 %406
    %v410 = vmul.f32 %v382, %v405
    %v411 = vmul.f32 %v397, %v407
    %414 = vrot.lane.b32.xlu0 %v410, 32
    %v415 = vpop.permute.xlu0 %414
    %416 = vrot.lane.b32.xlu0 %v411, 32
    %v417 = vpop.permute.xlu0 %416
    %v420 = vadd.f32 %v400, %v415
    %v421 = vadd.f32 %v401, %v417
    %v422 = vtanh.pop %v420
    %v423 = vtanh.pop %v421
    %426 = vrot.lane.b32.xlu0 %v422, 64
    %v427 = vpop.permute.xlu0 %426
    %428 = vrot.lane.b32.xlu0 %v423, 64
    %v429 = vpop.permute.xlu0 %428
    %v432 = vmul.f32 %v382, %v427
    %v433 = vmul.f32 %v397, %v429
    %436 = vrot.lane.b32.xlu0 %v432, 32
    %v437 = vpop.permute.xlu0 %436
    %438 = vrot.lane.b32.xlu0 %v433, 32
    %v439 = vpop.permute.xlu0 %438
    %442 = vst.msk [vmem:[#allocation10 + $0x2] sm:$0x1] %vm204, %v437
    %443 = vst.msk [vmem:[#allocation10 + $0xa] sm:$0x1] %vm204, %v439
    %v444 = vld [vmem:[#allocation4 + $0x3] sm:$0x1]
    %v445 = vld [vmem:[#allocation4 + $0xb] sm:$0x1]
    %v446 = vrot.slane %v433, 7
    %v447 = vsel %vm210, %v446, %v432
    %448 = vrot.lane.b32.xlu0 %v447, 32
    %v449 = vpop.permute.xlu0 %448
    %v450 = vsel %vm84, %v449, 0
    %452 = vmatpush.msra.mxu0 0.0
    %453 = vmatpush.msra.mxu0 0.0
    %454 = vmatpush.msra.mxu0 0.0
    %455 = vmatpush.msra.mxu0 0.0
    %456 = vmatpush.msra.mxu0 0.0
    %457 = vmatpush.msra.mxu0 0.0
    %458 = vmatpush.msra.mxu0 0.0
    %459 = vmatpush.msra.mxu0 0.0
    %460 = vmatpush.msra.mxu0 0.0
    %461 = vmatpush.msra.mxu0 0.0
    %462 = vmatpush.msra.mxu0 0.0
    %463 = vmatpush.msra.mxu0 0.0
    %464 = vmatpush.msra.mxu0 %v79
    %465 = vmatpush.msra.mxu0 %v78
    %466 = vmatpush.msra.mxu0 %v77
    %467 = vmatpush.msra.mxu0 %v76
    %468 = vmatmul.f32.gmra.mxu0 %v450
    %v469 = vpop.f32.mrf.mxu0
    %v470 = vadd.f32 0.0, %v469
    %471 = vdwg.mxu0
    %v473 = vrot.slane %v470, 1
    %v476 = vadd.f32 %v444, %v470
    %v477 = vadd.f32 %v445, %v473
    %v478 = vxor.u32 %v476, 2147483648
    %v479 = vxor.u32 %v477, 2147483648
    %v480 = vmul.f32 %v478, 1.442695
    %v481 = vpow.pop %v480
    %v482 = vmul.f32 %v479, 1.442695
    %v483 = vpow.pop %v482
    %v484 = vadd.f32 %v481, 1.0
    %v485 = vadd.f32 %v483, 1.0
    %v486 = vrcp.pop %v484
    %v487 = vmul.f32 %v484, %v486
    %v488 = vsub.f32 1.0, %v487
    %v489 = vmul.f32 %v486, %v488
    %v490 = vadd.f32 %v486, %v489
    %vm491 = vweird.f32 %v484
    %vm492 = vweird.f32 %v486
    %vm493 = vmor %vm491, %vm492
    %v494 = vsel %vm493, %v486, %v490
    %v495 = vand.u32 2147483647, %v484
    %vm496 = vcmp.eq.f32.partialorder %v495, 8.507059e+37
    %v497 = vand.u32 %v484, 2147483648
    %v498 = vor.u32 1.1754944e-38, %v497
    %v499 = vsel %vm496, %v498, %v494
    %v500 = vmul.f32 1.0, %v499
    %v501 = vrcp.pop %v485
    %v502 = vmul.f32 %v485, %v501
    %v503 = vsub.f32 1.0, %v502
    %v504 = vmul.f32 %v501, %v503
    %v505 = vadd.f32 %v501, %v504
    %vm506 = vweird.f32 %v485
    %vm507 = vweird.f32 %v501
    %vm508 = vmor %vm506, %vm507
    %v509 = vsel %vm508, %v501, %v505
    %v510 = vand.u32 2147483647, %v485
    %vm511 = vcmp.eq.f32.partialorder %v510, 8.507059e+37
    %v512 = vand.u32 %v485, 2147483648
    %v513 = vor.u32 1.1754944e-38, %v512
    %v514 = vsel %vm511, %v513, %v509
    %v515 = vmul.f32 1.0, %v514
    %v516 = vtanh.pop %v476
    %v517 = vtanh.pop %v477
    %v518 = vmul.f32 %v500, %v420
    %v519 = vmul.f32 %v515, %v421
    %522 = vrot.lane.b32.xlu0 %v516, 64
    %v523 = vpop.permute.xlu0 %522
    %524 = vrot.lane.b32.xlu0 %v517, 64
    %v525 = vpop.permute.xlu0 %524
    %v528 = vmul.f32 %v500, %v523
    %v529 = vmul.f32 %v515, %v525
    %532 = vrot.lane.b32.xlu0 %v528, 32
    %v533 = vpop.permute.xlu0 %532
    %534 = vrot.lane.b32.xlu0 %v529, 32
    %v535 = vpop.permute.xlu0 %534
    %v538 = vadd.f32 %v518, %v533
    %v539 = vadd.f32 %v519, %v535
    %v540 = vtanh.pop %v538
    %v541 = vtanh.pop %v539
    %544 = vrot.lane.b32.xlu0 %v540, 64
    %v545 = vpop.permute.xlu0 %544
    %546 = vrot.lane.b32.xlu0 %v541, 64
    %v547 = vpop.permute.xlu0 %546
    %v550 = vmul.f32 %v500, %v545
    %v551 = vmul.f32 %v515, %v547
    %554 = vrot.lane.b32.xlu0 %v550, 32
    %v555 = vpop.permute.xlu0 %554
    %556 = vrot.lane.b32.xlu0 %v551, 32
    %v557 = vpop.permute.xlu0 %556
    %560 = vst.msk [vmem:[#allocation10 + $0x3] sm:$0x1] %vm204, %v555
    %561 = vst.msk [vmem:[#allocation10 + $0xb] sm:$0x1] %vm204, %v557
    %v562 = vld [vmem:[#allocation4 + $0x4] sm:$0x1]
    %v563 = vld [vmem:[#allocation4 + $0xc] sm:$0x1]
    %v564 = vrot.slane %v551, 7
    %v565 = vsel %vm210, %v564, %v550
    %566 = vrot.lane.b32.xlu0 %v565, 32
    %v567 = vpop.permute.xlu0 %566
    %v568 = vsel %vm84, %v567, 0
    %570 = vmatpush.msra.mxu0 0.0
    %571 = vmatpush.msra.mxu0 0.0
    %572 = vmatpush.msra.mxu0 0.0
    %573 = vmatpush.msra.mxu0 0.0
    %574 = vmatpush.msra.mxu0 0.0
    %575 = vmatpush.msra.mxu0 0.0
    %576 = vmatpush.msra.mxu0 0.0
    %577 = vmatpush.msra.mxu0 0.0
    %578 = vmatpush.msra.mxu0 0.0
    %579 = vmatpush.msra.mxu0 0.0
    %580 = vmatpush.msra.mxu0 0.0
    %581 = vmatpush.msra.mxu0 0.0
    %582 = vmatpush.msra.mxu0 %v79
    %583 = vmatpush.msra.mxu0 %v78
    %584 = vmatpush.msra.mxu0 %v77
    %585 = vmatpush.msra.mxu0 %v76
    %586 = vmatmul.f32.gmra.mxu0 %v568
    %v587 = vpop.f32.mrf.mxu0
    %v588 = vadd.f32 0.0, %v587
    %589 = vdwg.mxu0
    %v591 = vrot.slane %v588, 1
    %v594 = vadd.f32 %v562, %v588
    %v595 = vadd.f32 %v563, %v591
    %v596 = vxor.u32 %v594, 2147483648
    %v597 = vxor.u32 %v595, 2147483648
    %v598 = vmul.f32 %v596, 1.442695
    %v599 = vpow.pop %v598
    %v600 = vmul.f32 %v597, 1.442695
    %v601 = vpow.pop %v600
    %v602 = vadd.f32 %v599, 1.0
    %v603 = vadd.f32 %v601, 1.0
    %v604 = vrcp.pop %v602
    %v605 = vmul.f32 %v602, %v604
    %v606 = vsub.f32 1.0, %v605
    %v607 = vmul.f32 %v604, %v606
    %v608 = vadd.f32 %v604, %v607
    %vm609 = vweird.f32 %v602
    %vm610 = vweird.f32 %v604
    %vm611 = vmor %vm609, %vm610
    %v612 = vsel %vm611, %v604, %v608
    %v613 = vand.u32 2147483647, %v602
    %vm614 = vcmp.eq.f32.partialorder %v613, 8.507059e+37
    %v615 = vand.u32 %v602, 2147483648
    %v616 = vor.u32 1.1754944e-38, %v615
    %v617 = vsel %vm614, %v616, %v612
    %v618 = vmul.f32 1.0, %v617
    %v619 = vrcp.pop %v603
    %v620 = vmul.f32 %v603, %v619
    %v621 = vsub.f32 1.0, %v620
    %v622 = vmul.f32 %v619, %v621
    %v623 = vadd.f32 %v619, %v622
    %vm624 = vweird.f32 %v603
    %vm625 = vweird.f32 %v619
    %vm626 = vmor %vm624, %vm625
    %v627 = vsel %vm626, %v619, %v623
    %v628 = vand.u32 2147483647, %v603
    %vm629 = vcmp.eq.f32.partialorder %v628, 8.507059e+37
    %v630 = vand.u32 %v603, 2147483648
    %v631 = vor.u32 1.1754944e-38, %v630
    %v632 = vsel %vm629, %v631, %v627
    %v633 = vmul.f32 1.0, %v632
    %v634 = vtanh.pop %v594
    %v635 = vtanh.pop %v595
    %v636 = vmul.f32 %v618, %v538
    %v637 = vmul.f32 %v633, %v539
    %640 = vrot.lane.b32.xlu0 %v634, 64
    %v641 = vpop.permute.xlu0 %640
    %642 = vrot.lane.b32.xlu0 %v635, 64
    %v643 = vpop.permute.xlu0 %642
    %v646 = vmul.f32 %v618, %v641
    %v647 = vmul.f32 %v633, %v643
    %650 = vrot.lane.b32.xlu0 %v646, 32
    %v651 = vpop.permute.xlu0 %650
    %652 = vrot.lane.b32.xlu0 %v647, 32
    %v653 = vpop.permute.xlu0 %652
    %v656 = vadd.f32 %v636, %v651
    %v657 = vadd.f32 %v637, %v653
    %v658 = vtanh.pop %v656
    %v659 = vtanh.pop %v657
    %662 = vrot.lane.b32.xlu0 %v658, 64
    %v663 = vpop.permute.xlu0 %662
    %664 = vrot.lane.b32.xlu0 %v659, 64
    %v665 = vpop.permute.xlu0 %664
    %v668 = vmul.f32 %v618, %v663
    %v669 = vmul.f32 %v633, %v665
    %672 = vrot.lane.b32.xlu0 %v668, 32
    %v673 = vpop.permute.xlu0 %672
    %674 = vrot.lane.b32.xlu0 %v669, 32
    %v675 = vpop.permute.xlu0 %674
    %678 = vst.msk [vmem:[#allocation10 + $0x4] sm:$0x1] %vm204, %v673
    %679 = vst.msk [vmem:[#allocation10 + $0xc] sm:$0x1] %vm204, %v675
    %v680 = vld [vmem:[#allocation4 + $0x5] sm:$0x1]
    %v681 = vld [vmem:[#allocation4 + $0xd] sm:$0x1]
    %v682 = vrot.slane %v669, 7
    %v683 = vsel %vm210, %v682, %v668
    %684 = vrot.lane.b32.xlu0 %v683, 32
    %v685 = vpop.permute.xlu0 %684
    %v686 = vsel %vm84, %v685, 0
    %688 = vmatpush.msra.mxu0 0.0
    %689 = vmatpush.msra.mxu0 0.0
    %690 = vmatpush.msra.mxu0 0.0
    %691 = vmatpush.msra.mxu0 0.0
    %692 = vmatpush.msra.mxu0 0.0
    %693 = vmatpush.msra.mxu0 0.0
    %694 = vmatpush.msra.mxu0 0.0
    %695 = vmatpush.msra.mxu0 0.0
    %696 = vmatpush.msra.mxu0 0.0
    %697 = vmatpush.msra.mxu0 0.0
    %698 = vmatpush.msra.mxu0 0.0
    %699 = vmatpush.msra.mxu0 0.0
    %700 = vmatpush.msra.mxu0 %v79
    %701 = vmatpush.msra.mxu0 %v78
    %702 = vmatpush.msra.mxu0 %v77
    %703 = vmatpush.msra.mxu0 %v76
    %704 = vmatmul.f32.gmra.mxu0 %v686
    %v705 = vpop.f32.mrf.mxu0
    %v706 = vadd.f32 0.0, %v705
    %707 = vdwg.mxu0
    %v709 = vrot.slane %v706, 1
    %v712 = vadd.f32 %v680, %v706
    %v713 = vadd.f32 %v681, %v709
    %v714 = vxor.u32 %v712, 2147483648
    %v715 = vxor.u32 %v713, 2147483648
    %v716 = vmul.f32 %v714, 1.442695
    %v717 = vpow.pop %v716
    %v718 = vmul.f32 %v715, 1.442695
    %v719 = vpow.pop %v718
    %v720 = vadd.f32 %v717, 1.0
    %v721 = vadd.f32 %v719, 1.0
    %v722 = vrcp.pop %v720
    %v723 = vmul.f32 %v720, %v722
    %v724 = vsub.f32 1.0, %v723
    %v725 = vmul.f32 %v722, %v724
    %v726 = vadd.f32 %v722, %v725
    %vm727 = vweird.f32 %v720
    %vm728 = vweird.f32 %v722
    %vm729 = vmor %vm727, %vm728
    %v730 = vsel %vm729, %v722, %v726
    %v731 = vand.u32 2147483647, %v720
    %vm732 = vcmp.eq.f32.partialorder %v731, 8.507059e+37
    %v733 = vand.u32 %v720, 2147483648
    %v734 = vor.u32 1.1754944e-38, %v733
    %v735 = vsel %vm732, %v734, %v730
    %v736 = vmul.f32 1.0, %v735
    %v737 = vrcp.pop %v721
    %v738 = vmul.f32 %v721, %v737
    %v739 = vsub.f32 1.0, %v738
    %v740 = vmul.f32 %v737, %v739
    %v741 = vadd.f32 %v737, %v740
    %vm742 = vweird.f32 %v721
    %vm743 = vweird.f32 %v737
    %vm744 = vmor %vm742, %vm743
    %v745 = vsel %vm744, %v737, %v741
    %v746 = vand.u32 2147483647, %v721
    %vm747 = vcmp.eq.f32.partialorder %v746, 8.507059e+37
    %v748 = vand.u32 %v721, 2147483648
    %v749 = vor.u32 1.1754944e-38, %v748
    %v750 = vsel %vm747, %v749, %v745
    %v751 = vmul.f32 1.0, %v750
    %v752 = vtanh.pop %v712
    %v753 = vtanh.pop %v713
    %v754 = vmul.f32 %v736, %v656
    %v755 = vmul.f32 %v751, %v657
    %758 = vrot.lane.b32.xlu0 %v752, 64
    %v759 = vpop.permute.xlu0 %758
    %760 = vrot.lane.b32.xlu0 %v753, 64
    %v761 = vpop.permute.xlu0 %760
    %v764 = vmul.f32 %v736, %v759
    %v765 = vmul.f32 %v751, %v761
    %768 = vrot.lane.b32.xlu0 %v764, 32
    %v769 = vpop.permute.xlu0 %768
    %770 = vrot.lane.b32.xlu0 %v765, 32
    %v771 = vpop.permute.xlu0 %770
    %v774 = vadd.f32 %v754, %v769
    %v775 = vadd.f32 %v755, %v771
    %v776 = vtanh.pop %v774
    %v777 = vtanh.pop %v775
    %780 = vrot.lane.b32.xlu0 %v776, 64
    %v781 = vpop.permute.xlu0 %780
    %782 = vrot.lane.b32.xlu0 %v777, 64
    %v783 = vpop.permute.xlu0 %782
    %v786 = vmul.f32 %v736, %v781
    %v787 = vmul.f32 %v751, %v783
    %790 = vrot.lane.b32.xlu0 %v786, 32
    %v791 = vpop.permute.xlu0 %790
    %792 = vrot.lane.b32.xlu0 %v787, 32
    %v793 = vpop.permute.xlu0 %792
    %796 = vst.msk [vmem:[#allocation10 + $0x5] sm:$0x1] %vm204, %v791
    %797 = vst.msk [vmem:[#allocation10 + $0xd] sm:$0x1] %vm204, %v793
    %v798 = vld [vmem:[#allocation4 + $0x6] sm:$0x1]
    %v799 = vld [vmem:[#allocation4 + $0xe] sm:$0x1]
    %v800 = vrot.slane %v787, 7
    %v801 = vsel %vm210, %v800, %v786
    %802 = vrot.lane.b32.xlu0 %v801, 32
    %v803 = vpop.permute.xlu0 %802
    %v804 = vsel %vm84, %v803, 0
    %806 = vmatpush.msra.mxu0 0.0
    %807 = vmatpush.msra.mxu0 0.0
    %808 = vmatpush.msra.mxu0 0.0
    %809 = vmatpush.msra.mxu0 0.0
    %810 = vmatpush.msra.mxu0 0.0
    %811 = vmatpush.msra.mxu0 0.0
    %812 = vmatpush.msra.mxu0 0.0
    %813 = vmatpush.msra.mxu0 0.0
    %814 = vmatpush.msra.mxu0 0.0
    %815 = vmatpush.msra.mxu0 0.0
    %816 = vmatpush.msra.mxu0 0.0
    %817 = vmatpush.msra.mxu0 0.0
    %818 = vmatpush.msra.mxu0 %v79
    %819 = vmatpush.msra.mxu0 %v78
    %820 = vmatpush.msra.mxu0 %v77
    %821 = vmatpush.msra.mxu0 %v76
    %822 = vmatmul.f32.gmra.mxu0 %v804
    %v823 = vpop.f32.mrf.mxu0
    %v824 = vadd.f32 0.0, %v823
    %825 = vdwg.mxu0
    %v827 = vrot.slane %v824, 1
    %v830 = vadd.f32 %v798, %v824
    %v831 = vadd.f32 %v799, %v827
    %v832 = vxor.u32 %v830, 2147483648
    %v833 = vxor.u32 %v831, 2147483648
    %v834 = vmul.f32 %v832, 1.442695
    %v835 = vpow.pop %v834
    %v836 = vmul.f32 %v833, 1.442695
    %v837 = vpow.pop %v836
    %v838 = vadd.f32 %v835, 1.0
    %v839 = vadd.f32 %v837, 1.0
    %v840 = vrcp.pop %v838
    %v841 = vmul.f32 %v838, %v840
    %v842 = vsub.f32 1.0, %v841
    %v843 = vmul.f32 %v840, %v842
    %v844 = vadd.f32 %v840, %v843
    %vm845 = vweird.f32 %v838
    %vm846 = vweird.f32 %v840
    %vm847 = vmor %vm845, %vm846
    %v848 = vsel %vm847, %v840, %v844
    %v849 = vand.u32 2147483647, %v838
    %vm850 = vcmp.eq.f32.partialorder %v849, 8.507059e+37
    %v851 = vand.u32 %v838, 2147483648
    %v852 = vor.u32 1.1754944e-38, %v851
    %v853 = vsel %vm850, %v852, %v848
    %v854 = vmul.f32 1.0, %v853
    %v855 = vrcp.pop %v839
    %v856 = vmul.f32 %v839, %v855
    %v857 = vsub.f32 1.0, %v856
    %v858 = vmul.f32 %v855, %v857
    %v859 = vadd.f32 %v855, %v858
    %vm860 = vweird.f32 %v839
    %vm861 = vweird.f32 %v855
    %vm862 = vmor %vm860, %vm861
    %v863 = vsel %vm862, %v855, %v859
    %v864 = vand.u32 2147483647, %v839
    %vm865 = vcmp.eq.f32.partialorder %v864, 8.507059e+37
    %v866 = vand.u32 %v839, 2147483648
    %v867 = vor.u32 1.1754944e-38, %v866
    %v868 = vsel %vm865, %v867, %v863
    %v869 = vmul.f32 1.0, %v868
    %v870 = vtanh.pop %v830
    %v871 = vtanh.pop %v831
    %v872 = vmul.f32 %v854, %v774
    %v873 = vmul.f32 %v869, %v775
    %876 = vrot.lane.b32.xlu0 %v870, 64
    %v877 = vpop.permute.xlu0 %876
    %878 = vrot.lane.b32.xlu0 %v871, 64
    %v879 = vpop.permute.xlu0 %878
    %v882 = vmul.f32 %v854, %v877
    %v883 = vmul.f32 %v869, %v879
    %886 = vrot.lane.b32.xlu0 %v882, 32
    %v887 = vpop.permute.xlu0 %886
    %888 = vrot.lane.b32.xlu0 %v883, 32
    %v889 = vpop.permute.xlu0 %888
    %v892 = vadd.f32 %v872, %v887
    %v893 = vadd.f32 %v873, %v889
    %v894 = vtanh.pop %v892
    %v895 = vtanh.pop %v893
    %898 = vrot.lane.b32.xlu0 %v894, 64
    %v899 = vpop.permute.xlu0 %898
    %900 = vrot.lane.b32.xlu0 %v895, 64
    %v901 = vpop.permute.xlu0 %900
    %v904 = vmul.f32 %v854, %v899
    %v905 = vmul.f32 %v869, %v901
    %908 = vrot.lane.b32.xlu0 %v904, 32
    %v909 = vpop.permute.xlu0 %908
    %910 = vrot.lane.b32.xlu0 %v905, 32
    %v911 = vpop.permute.xlu0 %910
    %914 = vst.msk [vmem:[#allocation10 + $0x6] sm:$0x1] %vm204, %v909
    %915 = vst.msk [vmem:[#allocation10 + $0xe] sm:$0x1] %vm204, %v911
    %v916 = vld [vmem:[#allocation4 + $0x7] sm:$0x1]
    %v917 = vld [vmem:[#allocation4 + $0xf] sm:$0x1]
    %v918 = vrot.slane %v905, 7
    %v919 = vsel %vm210, %v918, %v904
    %920 = vrot.lane.b32.xlu0 %v919, 32
    %v921 = vpop.permute.xlu0 %920
    %v922 = vsel %vm84, %v921, 0
    %924 = vmatpush.msra.mxu0 0.0
    %925 = vmatpush.msra.mxu0 0.0
    %926 = vmatpush.msra.mxu0 0.0
    %927 = vmatpush.msra.mxu0 0.0
    %928 = vmatpush.msra.mxu0 0.0
    %929 = vmatpush.msra.mxu0 0.0
    %930 = vmatpush.msra.mxu0 0.0
    %931 = vmatpush.msra.mxu0 0.0
    %932 = vmatpush.msra.mxu0 0.0
    %933 = vmatpush.msra.mxu0 0.0
    %934 = vmatpush.msra.mxu0 0.0
    %935 = vmatpush.msra.mxu0 0.0
    %936 = vmatpush.msra.mxu0 %v79
    %937 = vmatpush.msra.mxu0 %v78
    %938 = vmatpush.msra.mxu0 %v77
    %939 = vmatpush.msra.mxu0 %v76
    %940 = vmatmul.f32.gmra.mxu0 %v922
    %v941 = vpop.f32.mrf.mxu0
    %v942 = vadd.f32 0.0, %v941
    %943 = vdwg.mxu0
    %v945 = vrot.slane %v942, 1
    %v948 = vadd.f32 %v916, %v942
    %v949 = vadd.f32 %v917, %v945
    %v950 = vxor.u32 %v948, 2147483648
    %v951 = vxor.u32 %v949, 2147483648
    %v952 = vmul.f32 %v950, 1.442695
    %v953 = vpow.pop %v952
    %v954 = vmul.f32 %v951, 1.442695
    %v955 = vpow.pop %v954
    %v956 = vadd.f32 %v953, 1.0
    %v957 = vadd.f32 %v955, 1.0
    %v958 = vrcp.pop %v956
    %v959 = vmul.f32 %v956, %v958
    %v960 = vsub.f32 1.0, %v959
    %v961 = vmul.f32 %v958, %v960
    %v962 = vadd.f32 %v958, %v961
    %vm963 = vweird.f32 %v956
    %vm964 = vweird.f32 %v958
    %vm965 = vmor %vm963, %vm964
    %v966 = vsel %vm965, %v958, %v962
    %v967 = vand.u32 2147483647, %v956
    %vm968 = vcmp.eq.f32.partialorder %v967, 8.507059e+37
    %v969 = vand.u32 %v956, 2147483648
    %v970 = vor.u32 1.1754944e-38, %v969
    %v971 = vsel %vm968, %v970, %v966
    %v972 = vmul.f32 1.0, %v971
    %v973 = vrcp.pop %v957
    %v974 = vmul.f32 %v957, %v973
    %v975 = vsub.f32 1.0, %v974
    %v976 = vmul.f32 %v973, %v975
    %v977 = vadd.f32 %v973, %v976
    %vm978 = vweird.f32 %v957
    %vm979 = vweird.f32 %v973
    %vm980 = vmor %vm978, %vm979
    %v981 = vsel %vm980, %v973, %v977
    %v982 = vand.u32 2147483647, %v957
    %vm983 = vcmp.eq.f32.partialorder %v982, 8.507059e+37
    %v984 = vand.u32 %v957, 2147483648
    %v985 = vor.u32 1.1754944e-38, %v984
    %v986 = vsel %vm983, %v985, %v981
    %v987 = vmul.f32 1.0, %v986
    %v988 = vtanh.pop %v948
    %v989 = vtanh.pop %v949
    %v990 = vmul.f32 %v972, %v892
    %v991 = vmul.f32 %v987, %v893
    %994 = vrot.lane.b32.xlu0 %v988, 64
    %v995 = vpop.permute.xlu0 %994
    %996 = vrot.lane.b32.xlu0 %v989, 64
    %v997 = vpop.permute.xlu0 %996
    %v1000 = vmul.f32 %v972, %v995
    %v1001 = vmul.f32 %v987, %v997
    %1004 = vrot.lane.b32.xlu0 %v1000, 32
    %v1005 = vpop.permute.xlu0 %1004
    %1006 = vrot.lane.b32.xlu0 %v1001, 32
    %v1007 = vpop.permute.xlu0 %1006
    %v1010 = vadd.f32 %v990, %v1005
    %v1011 = vadd.f32 %v991, %v1007
    %v1012 = vtanh.pop %v1010
    %v1013 = vtanh.pop %v1011
    %1016 = vrot.lane.b32.xlu0 %v1012, 64
    %v1017 = vpop.permute.xlu0 %1016
    %1018 = vrot.lane.b32.xlu0 %v1013, 64
    %v1019 = vpop.permute.xlu0 %1018
    %v1022 = vmul.f32 %v972, %v1017
    %v1023 = vmul.f32 %v987, %v1019
    %1026 = vrot.lane.b32.xlu0 %v1022, 32
    %v1027 = vpop.permute.xlu0 %1026
    %1028 = vrot.lane.b32.xlu0 %v1023, 32
    %v1029 = vpop.permute.xlu0 %1028
    %1032 = vst.msk [vmem:[#allocation10 + $0x7] sm:$0x1] %vm204, %v1027
    %1033 = vst.msk [vmem:[#allocation10 + $0xf] sm:$0x1] %vm204, %v1029
    %v1034 = vrot.slane %v1023, 7
    %v1035 = vsel %vm210, %v1034, %v1022
    %1036 = vrot.lane.b32.xlu0 %v1035, 32
    %v1037 = vpop.permute.xlu0 %1036
    %vm1039 = vcmask 254976
    %1040 = vst.msk [vmem:[#allocation2] sm:$0x3] %vm1039, %v1037
    %v1043 = vrot.slane %v1011, 7
    %v1044 = vsel %vm210, %v1043, %v1010
    %1045 = vrot.lane.b32.xlu0 %v1044, 96
    %v1046 = vpop.permute.xlu0 %1045
    %1048 = vst.msk [vmem:[#allocation3] sm:$0x3] %vm1039, %v1046
    // Predicated region
    $region34: #{tpu_custom_call.1} parent=1 // pred_check
      %p1049 = pneg %p67
    $region35: #{tpu_custom_call.1} parent=1 // pred_check_branch
      %1051 = sbr.rel (%p1049) target = $region37
    $region36: #{tpu_custom_call.1} parent=1 // pred_region
      %1052 = vst.msk [vmem:[#allocation11] sm:$0x3] %vm1039, %v1037
      %1053 = vst.msk [vmem:[#allocation13] sm:$0x3] %vm1039, %v1046
    $region37: #{tpu_custom_call.1} parent=1 // pred_fallthru
      _
    // Predicated region
    $region38: #{tpu_custom_call.1} parent=1 // pred_check
      _
    $region39: #{tpu_custom_call.1} parent=1 // pred_check_branch
      %1055 = sbr.rel (0) target = $region41
    $region40: #{tpu_custom_call.1} parent=1 // pred_region
      %1057 = vsyncadd [#allocation6], 0
      %s1058 = sshll.u32 [#allocation10], 4
      %s1059 = int_to_ptr.vmem [resolvable:$true] %s1058
      %s1060 = sshll.u32 %s4, 4
      %s1061 = int_to_ptr.hbm [resolvable:$true] %s1060
      %1066 = dma.vmem_to_hbm [thread:$0]  %s1059, 256, %s1061, [#allocation6], 128, 128, 8
    $region41: #{tpu_custom_call.1} parent=1 // pred_fallthru
      _
    // Predicated region
    $region42: #{tpu_custom_call.1} parent=1 // pred_check
      _
    $region43: #{tpu_custom_call.1} parent=1 // pred_check_branch
      %1068 = sbr.rel (0) target = $region45
    $region44: #{tpu_custom_call.1} parent=1 // pred_region
      %1070 = vsyncadd [#allocation12], 0
      %s1072 = sshll.u32 [#allocation11], 4
      %s1073 = int_to_ptr.vmem [resolvable:$true] %s1072
      %s1074 = sshll.u32 %s5, 4
      %s1075 = int_to_ptr.hbm [resolvable:$true] %s1074
      %1077 = dma.vmem_to_hbm [thread:$0]  %s1073, 32, %s1075, [#allocation12]
    $region45: #{tpu_custom_call.1} parent=1 // pred_fallthru
      _
    // Predicated region
    $region46: #{tpu_custom_call.1} parent=1 // pred_check
      _
    $region47: #{tpu_custom_call.1} parent=1 // pred_check_branch
      %1079 = sbr.rel (0) target = $region49
    $region48: #{tpu_custom_call.1} parent=1 // pred_region
      %1081 = vsyncadd [#allocation12], 0
      %s1083 = sshll.u32 [#allocation13], 4
      %s1084 = int_to_ptr.vmem [resolvable:$true] %s1083
      %s1085 = sshll.u32 %s6, 4
      %s1086 = int_to_ptr.hbm [resolvable:$true] %s1085
      %1088 = dma.vmem_to_hbm [thread:$0]  %s1084, 32, %s1086, [#allocation12]
    $region49: #{tpu_custom_call.1} parent=1 // pred_fallthru
      _
    // Predicated region
    $region50: #{tpu_custom_call.1} parent=1 // pred_check
      _
    $region51: #{tpu_custom_call.1} parent=1 // pred_check_branch
      %1090 = sbr.rel (0) target = $region53
    $region52: #{tpu_custom_call.1} parent=1 // pred_region
      %1092 = dma.done [#allocation6], 256
    $region53: #{tpu_custom_call.1} parent=1 // pred_fallthru
      _
    // Predicated region
    $region54: #{tpu_custom_call.1} parent=1 // pred_check
      _
    $region55: #{tpu_custom_call.1} parent=1 // pred_check_branch
      %1094 = sbr.rel (0) target = $region57
    $region56: #{tpu_custom_call.1} parent=1 // pred_region
      %1096 = dma.done [#allocation12], 32
    $region57: #{tpu_custom_call.1} parent=1 // pred_fallthru
      _
    // Predicated region
    $region58: #{tpu_custom_call.1} parent=1 // pred_check
      _
    $region59: #{tpu_custom_call.1} parent=1 // pred_check_branch
      %1098 = sbr.rel (0) target = $region61
    $region60: #{tpu_custom_call.1} parent=1 // pred_region
      %1100 = dma.done [#allocation12], 32
    $region61: #{tpu_custom_call.1} parent=1 // pred_fallthru
      _
    %1101 = vsyncpa [#allocation5], 1
    %1102 = vsyncpa [#allocation8], 1
    %1103 = vsyncpa [#allocation6], 1
    %1104 = vsyncpa [#allocation12], 1

</llo_original>
